<compile_context>
chip_gen: v7x
topology: tpu7x:2x2x1
jax: 0.10.0
libtpu: 0.0.40
codegen_flags: <defaults>
</compile_context>

<pallas_src>
import functools

import jax
import jax.numpy as jnp
from jax.experimental import pallas as pl
from jax.experimental.pallas import tpu as pltpu

_MIB = 1024 * 1024


# ---------------------------------------------------------------------------
# Helpers
# ---------------------------------------------------------------------------
def _round_up(v, m):
    return ((v + m - 1) // m) * m


def _pad2d(x, rows, cols):
    r, c = x.shape
    return jnp.pad(x, ((0, rows - r), (0, cols - c)))


def _pick_tile_m(n_pad):
    # Prefer >= 2 row tiles so the "parallel" axis can be split across v7x's
    # two TensorCores; n_pad is always a multiple of 128.
    for t in (512, 384, 256, 128):
        if 2 * t <= n_pad and n_pad % t == 0:
            return t
    return min(n_pad, 512)


def _pick_tile_k(n_pad):
    # Wide reduction-axis blocks amortize per-grid-step pipeline overhead.
    for t in (2048, 1024, 512, 256, 128):
        if t <= n_pad and n_pad % t == 0:
            return t
    return n_pad


def _tiled_vmem_bytes(n_pad, d_pad, tile_m, tile_k, a_item, x_item,
                      x_resident, mix):
    a_buf = 2 * tile_m * tile_k * a_item
    x_buf = (2 * n_pad * d_pad * x_item) if x_resident \
        else (2 * tile_k * d_pad * x_item)
    w_buf = 2 * d_pad * d_pad * 4
    o_buf = 2 * tile_m * d_pad * 4
    g_buf = 2 * tile_m * d_pad * 4 if mix else 0
    return a_buf + x_buf + w_buf + o_buf + g_buf + 2 * _MIB


# ---------------------------------------------------------------------------
# Kernel 1: one GCN layer, tiled:
#   out = [relu]((A_hat @ X) @ W + b)   [optionally  lam*out + (1-lam)*gen]
# Grid = (row tiles, reduction tiles); accumulation happens directly in the
# revisited f32 output block (no scratch); X@W is fused into the finalize.
# ---------------------------------------------------------------------------
def _gcn_layer_kernel(*refs, tile_k, relu, mix, x_resident):
    if mix:
        lambd_ref, a_ref, x_ref, w_ref, b_ref, gen_ref, o_ref = refs
    else:
        a_ref, x_ref, w_ref, b_ref, o_ref = refs

    k = pl.program_id(1)

    @pl.when(k == 0)
    def _():
        o_ref[...] = jnp.zeros_like(o_ref)

    if x_resident:
        start = pl.multiple_of(k * tile_k, tile_k)
        x_blk = x_ref[pl.ds(start, tile_k), :]
    else:
        x_blk = x_ref[...]

    o_ref[...] += jnp.dot(a_ref[...], x_blk,
                          preferred_element_type=jnp.float32)

    @pl.when(k == pl.num_programs(1) - 1)
    def _():
        h = jnp.dot(o_ref[...], w_ref[...],
                    preferred_element_type=jnp.float32) + b_ref[...]
        if relu:
            h = jnp.maximum(h, 0.0)
        if mix:
            lam = lambd_ref[0, 0]
            h = lam * h + (1.0 - lam) * gen_ref[...]
        o_ref[...] = h


def gcn_layer(a_p, x_in, w_p, b_p, *, tile_m, tile_k, relu, gen_p, lambd,
              x_resident, vmem_limit):
    n_pad = a_p.shape[0]
    d_pad = w_p.shape[1]
    mix = gen_p is not None
    grid = (n_pad // tile_m, n_pad // tile_k)

    kernel = functools.partial(_gcn_layer_kernel, tile_k=tile_k, relu=relu,
                               mix=mix, x_resident=x_resident)

    in_specs = []
    args = []
    if mix:
        in_specs.append(pl.BlockSpec(memory_space=pltpu.MemorySpace.SMEM))
        args.append(jnp.asarray(lambd, jnp.float32).reshape(1, 1))
    in_specs.append(pl.BlockSpec((tile_m, tile_k), lambda i, k: (i, k)))
    args.append(a_p)
    if x_resident:
        # Whole activation resident in VMEM (constant index_map -> one DMA).
        in_specs.append(pl.BlockSpec((n_pad, d_pad), lambda i, k: (0, 0)))
    else:
        in_specs.append(pl.BlockSpec((tile_k, d_pad), lambda i, k: (k, 0)))
    args.append(x_in)
    in_specs.append(pl.BlockSpec((d_pad, d_pad), lambda i, k: (0, 0)))
    args.append(w_p)
    in_specs.append(pl.BlockSpec((1, d_pad), lambda i, k: (0, 0)))
    args.append(b_p)
    if mix:
        in_specs.append(pl.BlockSpec((tile_m, d_pad), lambda i, k: (i, 0)))
        args.append(gen_p)

    flops = 2 * n_pad * n_pad * d_pad + 2 * n_pad * d_pad * d_pad
    bytes_accessed = int(sum(a.size * a.dtype.itemsize for a in args)
                         + n_pad * d_pad * 4)

    return pl.pallas_call(
        kernel,
        out_shape=jax.ShapeDtypeStruct((n_pad, d_pad), jnp.float32),
        grid=grid,
        in_specs=in_specs,
        out_specs=pl.BlockSpec((tile_m, d_pad), lambda i, k: (i, 0)),
        compiler_params=pltpu.CompilerParams(
            dimension_semantics=("parallel", "arbitrary"),
            vmem_limit_bytes=int(vmem_limit)),
        cost_estimate=pl.CostEstimate(
            flops=int(flops), transcendentals=0,
            bytes_accessed=bytes_accessed),
    )(*args)


# ---------------------------------------------------------------------------
# Kernel 2: fully-fused forward for small graphs.  A_hat, the activation and
# all layer weights/biases stay resident; the whole 5-layer loop (+ optional
# lambda mix) runs in a single pallas_call.
# ---------------------------------------------------------------------------
def _fused_forward_kernel(*refs, num_layers, mix):
    if mix:
        lambd_ref, a_ref, x_ref, w_ref, b_ref, gen_ref, o_ref = refs
    else:
        a_ref, x_ref, w_ref, b_ref, o_ref = refs

    h = x_ref[...]
    for l in range(num_layers):
        ax = jnp.dot(a_ref[...], h.astype(a_ref.dtype),
                     preferred_element_type=jnp.float32)
        h = jnp.dot(ax, w_ref[l], preferred_element_type=jnp.float32) + b_ref[l]
        if l < num_layers - 1:
            h = jnp.maximum(h, 0.0)
    if mix:
        lam = lambd_ref[0, 0]
        h = lam * h + (1.0 - lam) * gen_ref[...]
    o_ref[...] = h.astype(o_ref.dtype)


def fused_forward(a_p, x_in, w_stack, b_stack, gen_p, lambd, *, vmem_limit):
    n_pad = a_p.shape[0]
    d_pad = x_in.shape[1]
    num_layers = w_stack.shape[0]
    mix = gen_p is not None

    kernel = functools.partial(_fused_forward_kernel, num_layers=num_layers,
                               mix=mix)

    in_specs = []
    args = []
    if mix:
        in_specs.append(pl.BlockSpec(memory_space=pltpu.MemorySpace.SMEM))
        args.append(jnp.asarray(lambd, jnp.float32).reshape(1, 1))
    in_specs += [
        pl.BlockSpec((n_pad, n_pad), lambda i: (0, 0)),
        pl.BlockSpec((n_pad, d_pad), lambda i: (0, 0)),
        pl.BlockSpec((num_layers, d_pad, d_pad), lambda i: (0, 0, 0)),
        pl.BlockSpec((num_layers, 1, d_pad), lambda i: (0, 0, 0)),
    ]
    args += [a_p, x_in, w_stack, b_stack]
    if mix:
        in_specs.append(pl.BlockSpec((n_pad, d_pad), lambda i: (0, 0)))
        args.append(gen_p)

    flops = num_layers * (2 * n_pad * n_pad * d_pad + 2 * n_pad * d_pad * d_pad)
    bytes_accessed = int(sum(a.size * a.dtype.itemsize for a in args)
                         + n_pad * d_pad * 4)

    return pl.pallas_call(
        kernel,
        out_shape=jax.ShapeDtypeStruct((n_pad, d_pad), jnp.float32),
        grid=(1,),
        in_specs=in_specs,
        out_specs=pl.BlockSpec((n_pad, d_pad), lambda i: (0, 0)),
        compiler_params=pltpu.CompilerParams(
            dimension_semantics=("arbitrary",),
            vmem_limit_bytes=int(vmem_limit)),
        cost_estimate=pl.CostEstimate(
            flops=int(flops), transcendentals=0,
            bytes_accessed=bytes_accessed),
    )(*args)


# ---------------------------------------------------------------------------
# Plain-JAX glue: symmetric GCN normalization (PyG gcn_norm, add_self_loops),
# built directly at the padded size and cast once to the compute dtype.
# TODO(synk): the edge-list scatter-add densification is a data-dependent
# scatter with no clean Pallas equivalent; it stays in plain JAX.
# TODO(synk): block-sparse / CSR aggregation (scalar-prefetch index maps)
# would avoid streaming O(N^2) dense bytes for sparse graphs.
# ---------------------------------------------------------------------------
def gcn_normalized_adjacency(edge_index, edge_weight, num_nodes, n_pad, dtype):
    src = edge_index[0]
    dst = edge_index[1]
    loops = jnp.arange(num_nodes, dtype=edge_index.dtype)
    src = jnp.concatenate([src, loops])
    dst = jnp.concatenate([dst, loops])
    w = jnp.concatenate(
        [edge_weight.astype(jnp.float32), jnp.ones((num_nodes,), jnp.float32)])
    deg = jnp.zeros((num_nodes,), jnp.float32).at[dst].add(w)
    deg_inv_sqrt = jnp.where(deg > 0, 1.0 / jnp.sqrt(deg), 0.0)
    norm = deg_inv_sqrt[src] * w * deg_inv_sqrt[dst]
    # out_i = sum_{edges j->i} norm * x_j   <=>   A_hat[i, j] += norm
    a = jnp.zeros((n_pad, n_pad), jnp.float32).at[dst, src].add(norm)
    return a.astype(dtype)


# ---------------------------------------------------------------------------
# Parameters (deterministic init) and forward pass
# ---------------------------------------------------------------------------
def init_params(key, in_features, hidden_dim):
    """GraphEncoder4Link: conv1 (in->hidden) + 5 convs (hidden->hidden)."""

    def glorot(k, fan_in, fan_out):
        limit = jnp.sqrt(6.0 / (fan_in + fan_out))
        return jax.random.uniform(k, (fan_in, fan_out), jnp.float32,
                                  -limit, limit)

    keys = jax.random.split(key, 12)
    params = {
        "conv1_w": glorot(keys[0], in_features, hidden_dim),
        "conv1_b": 0.01 * jax.random.normal(keys[6], (1, hidden_dim),
                                            jnp.float32),
    }
    for i in range(5):
        params[f"convs{i}_w"] = glorot(keys[i + 1], hidden_dim, hidden_dim)
        params[f"convs{i}_b"] = 0.01 * jax.random.normal(
            keys[7 + i], (1, hidden_dim), jnp.float32)
    return params


def link_generator_forward(params, x, edge_index, edge_weight,
                           gen_data=None, lambd=0.5, *,
                           compute_dtype=jnp.bfloat16,
                           allow_fused=True,
                           x_resident_max_bytes=8 * _MIB):
    """relu(conv1) -> relu(convs0..2) -> convs3 (no relu) -> lambda mix."""
    n, f_in = x.shape
    hidden = params["conv1_w"].shape[1]
    num_layers = 5
    cd = jnp.dtype(compute_dtype)

    d_pad = max(_round_up(f_in, 128), _round_up(hidden, 128))
    n_pad = _round_up(n, 128)

    # Dense A_hat, built already padded and cast once to the compute dtype.
    a_p = gcn_normalized_adjacency(edge_index, edge_weight, n, n_pad,
                                   compute_dtype)

    x_p = _pad2d(x.astype(jnp.float32), n_pad, d_pad)

    layer_ws = [params["conv1_w"]] + [params[f"convs{i}_w"] for i in range(4)]
    layer_bs = [params["conv1_b"]] + [params[f"convs{i}_b"] for i in range(4)]
    w_pads = [_pad2d(w.astype(jnp.float32), d_pad, d_pad) for w in layer_ws]
    b_pads = [_pad2d(b.astype(jnp.float32), 1, d_pad) for b in layer_bs]

    gen_p = None
    if gen_data is not None:
        gen_p = _pad2d(gen_data.astype(jnp.float32), n_pad, d_pad)

    # ---- fully-fused small-graph path -------------------------------------
    fused_bytes = (n_pad * n_pad * cd.itemsize              # A_hat
                   + n_pad * d_pad * cd.itemsize            # X
                   + num_layers * d_pad * d_pad * 4         # W stack
                   + num_layers * d_pad * 4                 # b stack
                   + (n_pad * d_pad * 4 if gen_p is not None else 0)
                   + n_pad * d_pad * 4                      # out
                   + 4 * n_pad * d_pad * 4)                 # intermediates
    if allow_fused and n_pad <= 2048 and fused_bytes <= 24 * _MIB:
        h = fused_forward(
            a_p, x_p.astype(compute_dtype),
            jnp.stack(w_pads), jnp.stack(b_pads),
            gen_p, lambd,
            vmem_limit=min(48 * _MIB, max(32 * _MIB, 2 * fused_bytes)))
        return h[:n, :hidden]

    # ---- tiled path ---------------------------------------------------------
    tile_m = _pick_tile_m(n_pad)
    tile_k = _pick_tile_k(n_pad)
    x_resident = n_pad * d_pad * cd.itemsize <= x_resident_max_bytes
    est = _tiled_vmem_bytes(n_pad, d_pad, tile_m, tile_k,
                            cd.itemsize, cd.itemsize, x_resident,
                            gen_p is not None)
    vmem_limit = min(48 * _MIB, max(32 * _MIB, est + 4 * _MIB))

    h = x_p
    for l in range(num_layers):
        is_last = l == num_layers - 1
        h = gcn_layer(
            a_p, h.astype(compute_dtype), w_pads[l], b_pads[l],
            tile_m=tile_m, tile_k=tile_k, relu=not is_last,
            gen_p=gen_p if (is_last and gen_p is not None) else None,
            lambd=lambd, x_resident=x_resident, vmem_limit=vmem_limit)
    return h[:n, :hidden]


# ---------------------------------------------------------------------------
# Demo / smoke test (with a pure-JAX reference check)
# ---------------------------------------------------------------------------
if __name__ == "__main__":
    key = jax.random.PRNGKey(0)
    k_x, k_w, k_gen, k_p = jax.random.split(key, 4)

    num_nodes = 8
    in_features = 4
    hidden_dim = 32

    x = jax.random.normal(k_x, (num_nodes, in_features), jnp.float32)

    # Small bidirectional ring graph with random edge weights.
    fwd = jnp.arange(num_nodes, dtype=jnp.int32)
    nxt = (fwd + 1) % num_nodes
    edge_index = jnp.stack(
        [jnp.concatenate([fwd, nxt]), jnp.concatenate([nxt, fwd])], axis=0)
    edge_weight = jax.random.uniform(
        k_w, (edge_index.shape[1],), jnp.float32, 0.5, 1.5)
    gen_data = jax.random.normal(k_gen, (num_nodes, hidden_dim), jnp.float32)

    params = init_params(k_p, in_features, hidden_dim)

    # Pure-JAX reference.
    a_ref_dense = gcn_normalized_adjacency(
        edge_index, edge_weight, num_nodes, num_nodes, jnp.float32)

    def ref_layer(h, w, b, relu):
        h = a_ref_dense @ (h @ w) + b
        return jnp.maximum(h, 0.0) if relu else h

    h_ref = ref_layer(x, params["conv1_w"], params["conv1_b"], True)
    for i in range(3):
        h_ref = ref_layer(h_ref, params[f"convs{i}_w"],
                          params[f"convs{i}_b"], True)
    h_ref = ref_layer(h_ref, params["convs3_w"], params["convs3_b"], False)
    ref = 0.5 * h_ref + 0.5 * gen_data

    # 1) fused single-kernel path, f32 operands (exact check).
    out_fused = link_generator_forward(
        params, x, edge_index, edge_weight, gen_data=gen_data, lambd=0.5,
        compute_dtype=jnp.float32)
    jax.block_until_ready(out_fused)
    assert out_fused.shape == (num_nodes, hidden_dim)
    assert jnp.isfinite(out_fused).all()
    assert jnp.allclose(out_fused, ref, atol=1e-4, rtol=1e-4)

    # 2) fused path without gen_data (embedding only), f32.
    out_embed_fused = link_generator_forward(
        params, x, edge_index, edge_weight, gen_data=None,
        compute_dtype=jnp.float32)
    assert jnp.allclose(out_embed_fused, h_ref, atol=1e-4, rtol=1e-4)

    # 3) tiled path (resident X, fused mix in last layer), f32.
    out_tiled = link_generator_forward(
        params, x, edge_index, edge_weight, gen_data=gen_data, lambd=0.5,
        compute_dtype=jnp.float32, allow_fused=False)
    assert jnp.allclose(out_tiled, ref, atol=1e-4, rtol=1e-4)

    # 4) tiled path, streamed X, no mix, f32.
    out_embed_tiled = link_generator_forward(
        params, x, edge_index, edge_weight, gen_data=None,
        compute_dtype=jnp.float32, allow_fused=False, x_resident_max_bytes=0)
    assert jnp.allclose(out_embed_tiled, h_ref, atol=1e-4, rtol=1e-4)

    # 5) default bfloat16 MXU operands (f32 accumulation) — loose check.
    out_bf16 = link_generator_forward(
        params, x, edge_index, edge_weight, gen_data=gen_data, lambd=0.5)
    jax.block_until_ready(out_bf16)
    assert jnp.isfinite(out_bf16).all()
    assert jnp.allclose(out_bf16, ref, atol=0.15, rtol=0.15)

    print("KERNEL_OK")
</pallas_src>

<mosaic_0001>
module attributes {stable_mosaic.version = 11 : i64} {
  func.func @_fused_forward_kernel(%arg0: i32, %arg1: memref<1x1xf32, #tpu.memory_space<smem>>, %arg2: memref<128x128xf32, #tpu.memory_space<vmem>>, %arg3: memref<128x128xf32, #tpu.memory_space<vmem>>, %arg4: memref<5x128x128xf32, #tpu.memory_space<vmem>>, %arg5: memref<5x1x128xf32, #tpu.memory_space<vmem>>, %arg6: memref<128x128xf32, #tpu.memory_space<vmem>>, %arg7: memref<128x128xf32, #tpu.memory_space<vmem>>) attributes {dimension_semantics = [#tpu.dimension_semantics<arbitrary>], iteration_bounds = array<i64: 1>, scalar_prefetch = 0 : i64, scratch_operands = 0 : i64, tpu.core_type = #tpu.core_type<tc>, window_params = [{transform_indices = @transform_0, window_bounds = array<i64: 1, 1>}, {pipeline_mode = #tpu.pipeline_mode<synchronous>, transform_indices = @transform_1, window_bounds = array<i64: 128, 128>}, {pipeline_mode = #tpu.pipeline_mode<synchronous>, transform_indices = @transform_2, window_bounds = array<i64: 128, 128>}, {pipeline_mode = #tpu.pipeline_mode<synchronous>, transform_indices = @transform_3, window_bounds = array<i64: 5, 128, 128>}, {pipeline_mode = #tpu.pipeline_mode<synchronous>, transform_indices = @transform_4, window_bounds = array<i64: 5, 1, 128>}, {pipeline_mode = #tpu.pipeline_mode<synchronous>, transform_indices = @transform_5, window_bounds = array<i64: 128, 128>}, {pipeline_mode = #tpu.pipeline_mode<synchronous>, transform_indices = @transform_6, window_bounds = array<i64: 128, 128>}]} {
    %c0 = arith.constant 0 : index
    %c0_0 = arith.constant 0 : index
    %0 = vector.load %arg3[%c0, %c0_0] : memref<128x128xf32, #tpu.memory_space<vmem>>, vector<128x128xf32>
    %c0_1 = arith.constant 0 : index
    %c0_2 = arith.constant 0 : index
    %1 = vector.load %arg2[%c0_1, %c0_2] : memref<128x128xf32, #tpu.memory_space<vmem>>, vector<128x128xf32>
    %cst = arith.constant dense<0.000000e+00> : vector<128x128xf32>
    %2 = tpu.matmul %1, %0, %cst {dimension_numbers = #tpu.dot_dimension_numbers<[1], [0], [0], [1], [0, 0, 1, 1], [], []>} : vector<128x128xf32>, vector<128x128xf32>, vector<128x128xf32> -> vector<128x128xf32>
    %c0_3 = arith.constant 0 : index
    %c0_4 = arith.constant 0 : index
    %c0_5 = arith.constant 0 : index
    %3 = vector.load %arg4[%c0_3, %c0_4, %c0_5] : memref<5x128x128xf32, #tpu.memory_space<vmem>>, vector<1x128x128xf32>
    %4 = vector.shape_cast %3 : vector<1x128x128xf32> to vector<128x128xf32>
    %cst_6 = arith.constant dense<0.000000e+00> : vector<128x128xf32>
    %5 = tpu.matmul %2, %4, %cst_6 {dimension_numbers = #tpu.dot_dimension_numbers<[1], [0], [0], [1], [0, 0, 1, 1], [], []>} : vector<128x128xf32>, vector<128x128xf32>, vector<128x128xf32> -> vector<128x128xf32>
    %c0_7 = arith.constant 0 : index
    %c0_8 = arith.constant 0 : index
    %c0_9 = arith.constant 0 : index
    %6 = vector.load %arg5[%c0_7, %c0_8, %c0_9] : memref<5x1x128xf32, #tpu.memory_space<vmem>>, vector<1x1x128xf32>
    %7 = vector.shape_cast %6 : vector<1x1x128xf32> to vector<1x128xf32>
    %8 = vector.broadcast %7 : vector<1x128xf32> to vector<128x128xf32>
    %9 = arith.addf %5, %8 : vector<128x128xf32>
    %cst_10 = arith.constant 0.000000e+00 : f32
    %10 = vector.broadcast %cst_10 : f32 to vector<128x128xf32>
    %11 = arith.maximumf %9, %10 : vector<128x128xf32>
    %c0_11 = arith.constant 0 : index
    %c0_12 = arith.constant 0 : index
    %12 = vector.load %arg2[%c0_11, %c0_12] : memref<128x128xf32, #tpu.memory_space<vmem>>, vector<128x128xf32>
    %cst_13 = arith.constant dense<0.000000e+00> : vector<128x128xf32>
    %13 = tpu.matmul %12, %11, %cst_13 {dimension_numbers = #tpu.dot_dimension_numbers<[1], [0], [0], [1], [0, 0, 1, 1], [], []>} : vector<128x128xf32>, vector<128x128xf32>, vector<128x128xf32> -> vector<128x128xf32>
    %c1 = arith.constant 1 : index
    %c0_14 = arith.constant 0 : index
    %c0_15 = arith.constant 0 : index
    %14 = vector.load %arg4[%c1, %c0_14, %c0_15] : memref<5x128x128xf32, #tpu.memory_space<vmem>>, vector<1x128x128xf32>
    %15 = vector.shape_cast %14 : vector<1x128x128xf32> to vector<128x128xf32>
    %cst_16 = arith.constant dense<0.000000e+00> : vector<128x128xf32>
    %16 = tpu.matmul %13, %15, %cst_16 {dimension_numbers = #tpu.dot_dimension_numbers<[1], [0], [0], [1], [0, 0, 1, 1], [], []>} : vector<128x128xf32>, vector<128x128xf32>, vector<128x128xf32> -> vector<128x128xf32>
    %c1_17 = arith.constant 1 : index
    %c0_18 = arith.constant 0 : index
    %c0_19 = arith.constant 0 : index
    %17 = vector.load %arg5[%c1_17, %c0_18, %c0_19] : memref<5x1x128xf32, #tpu.memory_space<vmem>>, vector<1x1x128xf32>
    %18 = vector.shape_cast %17 : vector<1x1x128xf32> to vector<1x128xf32>
    %19 = vector.broadcast %18 : vector<1x128xf32> to vector<128x128xf32>
    %20 = arith.addf %16, %19 : vector<128x128xf32>
    %cst_20 = arith.constant 0.000000e+00 : f32
    %21 = vector.broadcast %cst_20 : f32 to vector<128x128xf32>
    %22 = arith.maximumf %20, %21 : vector<128x128xf32>
    %c0_21 = arith.constant 0 : index
    %c0_22 = arith.constant 0 : index
    %23 = vector.load %arg2[%c0_21, %c0_22] : memref<128x128xf32, #tpu.memory_space<vmem>>, vector<128x128xf32>
    %cst_23 = arith.constant dense<0.000000e+00> : vector<128x128xf32>
    %24 = tpu.matmul %23, %22, %cst_23 {dimension_numbers = #tpu.dot_dimension_numbers<[1], [0], [0], [1], [0, 0, 1, 1], [], []>} : vector<128x128xf32>, vector<128x128xf32>, vector<128x128xf32> -> vector<128x128xf32>
    %c2 = arith.constant 2 : index
    %c0_24 = arith.constant 0 : index
    %c0_25 = arith.constant 0 : index
    %25 = vector.load %arg4[%c2, %c0_24, %c0_25] : memref<5x128x128xf32, #tpu.memory_space<vmem>>, vector<1x128x128xf32>
    %26 = vector.shape_cast %25 : vector<1x128x128xf32> to vector<128x128xf32>
    %cst_26 = arith.constant dense<0.000000e+00> : vector<128x128xf32>
    %27 = tpu.matmul %24, %26, %cst_26 {dimension_numbers = #tpu.dot_dimension_numbers<[1], [0], [0], [1], [0, 0, 1, 1], [], []>} : vector<128x128xf32>, vector<128x128xf32>, vector<128x128xf32> -> vector<128x128xf32>
    %c2_27 = arith.constant 2 : index
    %c0_28 = arith.constant 0 : index
    %c0_29 = arith.constant 0 : index
    %28 = vector.load %arg5[%c2_27, %c0_28, %c0_29] : memref<5x1x128xf32, #tpu.memory_space<vmem>>, vector<1x1x128xf32>
    %29 = vector.shape_cast %28 : vector<1x1x128xf32> to vector<1x128xf32>
    %30 = vector.broadcast %29 : vector<1x128xf32> to vector<128x128xf32>
    %31 = arith.addf %27, %30 : vector<128x128xf32>
    %cst_30 = arith.constant 0.000000e+00 : f32
    %32 = vector.broadcast %cst_30 : f32 to vector<128x128xf32>
    %33 = arith.maximumf %31, %32 : vector<128x128xf32>
    %c0_31 = arith.constant 0 : index
    %c0_32 = arith.constant 0 : index
    %34 = vector.load %arg2[%c0_31, %c0_32] : memref<128x128xf32, #tpu.memory_space<vmem>>, vector<128x128xf32>
    %cst_33 = arith.constant dense<0.000000e+00> : vector<128x128xf32>
    %35 = tpu.matmul %34, %33, %cst_33 {dimension_numbers = #tpu.dot_dimension_numbers<[1], [0], [0], [1], [0, 0, 1, 1], [], []>} : vector<128x128xf32>, vector<128x128xf32>, vector<128x128xf32> -> vector<128x128xf32>
    %c3 = arith.constant 3 : index
    %c0_34 = arith.constant 0 : index
    %c0_35 = arith.constant 0 : index
    %36 = vector.load %arg4[%c3, %c0_34, %c0_35] : memref<5x128x128xf32, #tpu.memory_space<vmem>>, vector<1x128x128xf32>
    %37 = vector.shape_cast %36 : vector<1x128x128xf32> to vector<128x128xf32>
    %cst_36 = arith.constant dense<0.000000e+00> : vector<128x128xf32>
    %38 = tpu.matmul %35, %37, %cst_36 {dimension_numbers = #tpu.dot_dimension_numbers<[1], [0], [0], [1], [0, 0, 1, 1], [], []>} : vector<128x128xf32>, vector<128x128xf32>, vector<128x128xf32> -> vector<128x128xf32>
    %c3_37 = arith.constant 3 : index
    %c0_38 = arith.constant 0 : index
    %c0_39 = arith.constant 0 : index
    %39 = vector.load %arg5[%c3_37, %c0_38, %c0_39] : memref<5x1x128xf32, #tpu.memory_space<vmem>>, vector<1x1x128xf32>
    %40 = vector.shape_cast %39 : vector<1x1x128xf32> to vector<1x128xf32>
    %41 = vector.broadcast %40 : vector<1x128xf32> to vector<128x128xf32>
    %42 = arith.addf %38, %41 : vector<128x128xf32>
    %cst_40 = arith.constant 0.000000e+00 : f32
    %43 = vector.broadcast %cst_40 : f32 to vector<128x128xf32>
    %44 = arith.maximumf %42, %43 : vector<128x128xf32>
    %c0_41 = arith.constant 0 : index
    %c0_42 = arith.constant 0 : index
    %45 = vector.load %arg2[%c0_41, %c0_42] : memref<128x128xf32, #tpu.memory_space<vmem>>, vector<128x128xf32>
    %cst_43 = arith.constant dense<0.000000e+00> : vector<128x128xf32>
    %46 = tpu.matmul %45, %44, %cst_43 {dimension_numbers = #tpu.dot_dimension_numbers<[1], [0], [0], [1], [0, 0, 1, 1], [], []>} : vector<128x128xf32>, vector<128x128xf32>, vector<128x128xf32> -> vector<128x128xf32>
    %c4 = arith.constant 4 : index
    %c0_44 = arith.constant 0 : index
    %c0_45 = arith.constant 0 : index
    %47 = vector.load %arg4[%c4, %c0_44, %c0_45] : memref<5x128x128xf32, #tpu.memory_space<vmem>>, vector<1x128x128xf32>
    %48 = vector.shape_cast %47 : vector<1x128x128xf32> to vector<128x128xf32>
    %cst_46 = arith.constant dense<0.000000e+00> : vector<128x128xf32>
    %49 = tpu.matmul %46, %48, %cst_46 {dimension_numbers = #tpu.dot_dimension_numbers<[1], [0], [0], [1], [0, 0, 1, 1], [], []>} : vector<128x128xf32>, vector<128x128xf32>, vector<128x128xf32> -> vector<128x128xf32>
    %c4_47 = arith.constant 4 : index
    %c0_48 = arith.constant 0 : index
    %c0_49 = arith.constant 0 : index
    %50 = vector.load %arg5[%c4_47, %c0_48, %c0_49] : memref<5x1x128xf32, #tpu.memory_space<vmem>>, vector<1x1x128xf32>
    %51 = vector.shape_cast %50 : vector<1x1x128xf32> to vector<1x128xf32>
    %52 = vector.broadcast %51 : vector<1x128xf32> to vector<128x128xf32>
    %53 = arith.addf %49, %52 : vector<128x128xf32>
    %c0_50 = arith.constant 0 : index
    %c0_51 = arith.constant 0 : index
    %54 = memref.load %arg1[%c0_50, %c0_51] : memref<1x1xf32, #tpu.memory_space<smem>>
    %55 = vector.broadcast %54 : f32 to vector<128x128xf32>
    %56 = arith.mulf %55, %53 : vector<128x128xf32>
    %cst_52 = arith.constant 1.000000e+00 : f32
    %57 = arith.subf %cst_52, %54 : f32
    %c0_53 = arith.constant 0 : index
    %c0_54 = arith.constant 0 : index
    %58 = vector.load %arg6[%c0_53, %c0_54] : memref<128x128xf32, #tpu.memory_space<vmem>>, vector<128x128xf32>
    %59 = vector.broadcast %57 : f32 to vector<128x128xf32>
    %60 = arith.mulf %59, %58 : vector<128x128xf32>
    %61 = arith.addf %56, %60 : vector<128x128xf32>
    %c0_55 = arith.constant 0 : index
    %c0_56 = arith.constant 0 : index
    %62 = vector.load %arg7[%c0_55, %c0_56] : memref<128x128xf32, #tpu.memory_space<vmem>>, vector<128x128xf32>
    tpu.vector_store %arg7[%c0_55, %c0_56], %61 {strides = array<i32>} : memref<128x128xf32, #tpu.memory_space<vmem>>, vector<128x128xf32>,
    return
  }
  func.func @transform_0(%arg0: i32) -> (i32, i32) {
    %c0_i32 = arith.constant 0 : i32
    %c0_i32_0 = arith.constant 0 : i32
    %c0_i32_1 = arith.constant 0 : i32
    return %c0_i32, %c0_i32_0 : i32, i32
  }
  func.func @transform_1(%arg0: i32) -> (i32, i32) {
    %c0_i32 = arith.constant 0 : i32
    %c0_i32_0 = arith.constant 0 : i32
    %c0_i32_1 = arith.constant 0 : i32
    return %c0_i32, %c0_i32_0 : i32, i32
  }
  func.func @transform_2(%arg0: i32) -> (i32, i32) {
    %c0_i32 = arith.constant 0 : i32
    %c0_i32_0 = arith.constant 0 : i32
    %c0_i32_1 = arith.constant 0 : i32
    return %c0_i32, %c0_i32_0 : i32, i32
  }
  func.func @transform_3(%arg0: i32) -> (i32, i32, i32) {
    %c0_i32 = arith.constant 0 : i32
    %c0_i32_0 = arith.constant 0 : i32
    %c0_i32_1 = arith.constant 0 : i32
    %c0_i32_2 = arith.constant 0 : i32
    return %c0_i32, %c0_i32_0, %c0_i32_1 : i32, i32, i32
  }
  func.func @transform_4(%arg0: i32) -> (i32, i32, i32) {
    %c0_i32 = arith.constant 0 : i32
    %c0_i32_0 = arith.constant 0 : i32
    %c0_i32_1 = arith.constant 0 : i32
    %c0_i32_2 = arith.constant 0 : i32
    return %c0_i32, %c0_i32_0, %c0_i32_1 : i32, i32, i32
  }
  func.func @transform_5(%arg0: i32) -> (i32, i32) {
    %c0_i32 = arith.constant 0 : i32
    %c0_i32_0 = arith.constant 0 : i32
    %c0_i32_1 = arith.constant 0 : i32
    return %c0_i32, %c0_i32_0 : i32, i32
  }
  func.func @transform_6(%arg0: i32) -> (i32, i32) {
    %c0_i32 = arith.constant 0 : i32
    %c0_i32_0 = arith.constant 0 : i32
    %c0_i32_1 = arith.constant 0 : i32
    return %c0_i32, %c0_i32_0 : i32, i32
  }
}

</mosaic_0001>

<llo_original>
// kernel: tpu_custom_call.1
$region0: #{tpu_custom_call.1}
  #allocation0 [shape = 'u32[]', space=smem, size = 0x4, offset = 0x4, fixed_abs, tag = 'smem constant byte address 0x4 - core index']
  #allocation1 [shape = 'u32[144,128]{1,0:T(1,128)}', space=vmem, size = 0x12000, scoped, tag = 'internal scratch']
  #allocation2 [shape = 'f32[1,1]{1,0:T(1,128)S(6)}', space=smem, size = 0x200, scoped, tag = 'scoped memory for tpu_custom_call.1']
  %s0 = inlined_call_operand.<no memory space> [shape: f32[1,1], index: 0, kind: input, shape index: {}]
  %s1 = inlined_call_operand.hbm [shape: f32[128,128], index: 1, kind: input, shape index: {}]
  %s2 = inlined_call_operand.hbm [shape: f32[128,128], index: 2, kind: input, shape index: {}]
  %s3 = inlined_call_operand.hbm [shape: f32[5,128,128], index: 3, kind: input, shape index: {}]
  %s4 = inlined_call_operand.vmem [shape: f32[5,1,128], index: 4, kind: input, shape index: {}]
  %s5 = inlined_call_operand.hbm [shape: f32[128,128], index: 5, kind: input, shape index: {}]
  %s6 = inlined_call_operand.hbm [shape: f32[128,128], index: 6, kind: output, shape index: {}]
  %s7 = sld [smem:[#allocation0]]
  $region50: #{tpu_custom_call.1} parent=0
    _
  %s9 = ssub.s32 1, %s7
  %s10 = scalar_select 0, %s9, %s7
  %11 = sst [smem:[#allocation2]] %s0
  $region1: #{tpu_custom_call.1} parent=0
    #allocation3 [shape = 'u8[65536]{0}', space=vmem, size = 0x10000, scoped, tag = 'input window, operand 1, single buffered']
    #allocation4 [shape = 's32[1]{0}', space=sflag, size = 0x4, scoped, tag = 'scoped memory for tpu_custom_call.1']
    #allocation5 [shape = 's32[1]{0}', space=sflag, size = 0x4, scoped, tag = 'scoped memory for tpu_custom_call.1']
    #allocation6 [shape = 'u8[65536]{0}', space=vmem, size = 0x10000, scoped, tag = 'input window, operand 2, single buffered']
    #allocation7 [shape = 's32[1]{0}', space=sflag, size = 0x4, scoped, tag = 'scoped memory for tpu_custom_call.1']
    #allocation8 [shape = 'u8[327680]{0}', space=vmem, size = 0x50000, scoped, tag = 'input window, operand 3, single buffered']
    #allocation9 [shape = 'u8[65536]{0}', space=vmem, size = 0x10000, scoped, tag = 'input window, operand 5, single buffered']
    #allocation10 [shape = 's32[1]{0}', space=sflag, size = 0x4, scoped, tag = 'scoped memory for tpu_custom_call.1']
    #allocation11 [shape = 'u8[65536]{0}', space=vmem, size = 0x10000, scoped, tag = 'output window, operand 0, single buffered']
    %12 = vsyncpa [#allocation4], 0
    %13 = vsyncpa [#allocation7], 0
    %14 = vsyncpa [#allocation10], 0
    %15 = vsyncpa [#allocation5], 0
    // Predicated region
    $region2: #{tpu_custom_call.1} parent=1 // pred_check
      _
    $region3: #{tpu_custom_call.1} parent=1 // pred_check_branch
      %17 = sbr.rel (0) target = $region5
    $region4: #{tpu_custom_call.1} parent=1 // pred_region
      _
    $region5: #{tpu_custom_call.1} parent=1 // pred_fallthru
      _
    // Predicated region
    $region6: #{tpu_custom_call.1} parent=1 // pred_check
      _
    $region7: #{tpu_custom_call.1} parent=1 // pred_check_branch
      %19 = sbr.rel (0) target = $region9
    $region8: #{tpu_custom_call.1} parent=1 // pred_region
      %s21 = ssub.s32 2048, 2048
      %22 = vsyncadd [#allocation4], %s21
      %s23 = sshll.u32 [#allocation3], 4
      %s24 = int_to_ptr.vmem [resolvable:$true] %s23
      %29 = dma.hbm_to_vmem [thread:$0]  %s1, 2048, %s24, [#allocation4], 128, 128, 8
    $region9: #{tpu_custom_call.1} parent=1 // pred_fallthru
      _
    // Predicated region
    $region10: #{tpu_custom_call.1} parent=1 // pred_check
      _
    $region11: #{tpu_custom_call.1} parent=1 // pred_check_branch
      %31 = sbr.rel (0) target = $region13
    $region12: #{tpu_custom_call.1} parent=1 // pred_region
      %s33 = ssub.s32 2048, 2048
      %34 = vsyncadd [#allocation7], %s33
      %s35 = sshll.u32 [#allocation6], 4
      %s36 = int_to_ptr.vmem [resolvable:$true] %s35
      %41 = dma.hbm_to_vmem [thread:$0]  %s2, 2048, %s36, [#allocation7], 128, 128, 8
    $region13: #{tpu_custom_call.1} parent=1 // pred_fallthru
      _
    // Predicated region
    $region14: #{tpu_custom_call.1} parent=1 // pred_check
      _
    $region15: #{tpu_custom_call.1} parent=1 // pred_check_branch
      %43 = sbr.rel (0) target = $region17
    $region16: #{tpu_custom_call.1} parent=1 // pred_region
      %s45 = ssub.s32 10240, 10240
      %46 = vsyncadd [#allocation7], %s45
      %s47 = sshll.u32 [#allocation8], 4
      %s48 = int_to_ptr.vmem [resolvable:$true] %s47
      %53 = dma.hbm_to_vmem [thread:$0]  %s3, 10240, %s48, [#allocation7], 128, 128, 8
    $region17: #{tpu_custom_call.1} parent=1 // pred_fallthru
      _
    // Predicated region
    $region18: #{tpu_custom_call.1} parent=1 // pred_check
      _
    $region19: #{tpu_custom_call.1} parent=1 // pred_check_branch
      %55 = sbr.rel (0) target = $region21
    $region20: #{tpu_custom_call.1} parent=1 // pred_region
      _
    $region21: #{tpu_custom_call.1} parent=1 // pred_fallthru
      _
    // Predicated region
    $region22: #{tpu_custom_call.1} parent=1 // pred_check
      _
    $region23: #{tpu_custom_call.1} parent=1 // pred_check_branch
      %57 = sbr.rel (0) target = $region25
    $region24: #{tpu_custom_call.1} parent=1 // pred_region
      %s59 = ssub.s32 2048, 2048
      %60 = vsyncadd [#allocation10], %s59
      %s61 = sshll.u32 [#allocation9], 4
      %s62 = int_to_ptr.vmem [resolvable:$true] %s61
      %67 = dma.hbm_to_vmem [thread:$0]  %s5, 2048, %s62, [#allocation10], 128, 128, 8
    $region25: #{tpu_custom_call.1} parent=1 // pred_fallthru
      _
    // Predicated region
    $region26: #{tpu_custom_call.1} parent=1 // pred_check
      _
    $region27: #{tpu_custom_call.1} parent=1 // pred_check_branch
      %69 = sbr.rel (0) target = $region29
    $region28: #{tpu_custom_call.1} parent=1 // pred_region
      %70 = dma.done [#allocation4], 2048
    $region29: #{tpu_custom_call.1} parent=1 // pred_fallthru
      _
    // Predicated region
    $region30: #{tpu_custom_call.1} parent=1 // pred_check
      _
    $region31: #{tpu_custom_call.1} parent=1 // pred_check_branch
      %72 = sbr.rel (0) target = $region33
    $region32: #{tpu_custom_call.1} parent=1 // pred_region
      %73 = dma.done [#allocation7], 2048
    $region33: #{tpu_custom_call.1} parent=1 // pred_fallthru
      _
    // Predicated region
    $region34: #{tpu_custom_call.1} parent=1 // pred_check
      _
    $region35: #{tpu_custom_call.1} parent=1 // pred_check_branch
      %75 = sbr.rel (0) target = $region37
    $region36: #{tpu_custom_call.1} parent=1 // pred_region
      %76 = dma.done [#allocation7], 10240
    $region37: #{tpu_custom_call.1} parent=1 // pred_fallthru
      _
    // Predicated region
    $region38: #{tpu_custom_call.1} parent=1 // pred_check
      _
    $region39: #{tpu_custom_call.1} parent=1 // pred_check_branch
      %78 = sbr.rel (0) target = $region41
    $region40: #{tpu_custom_call.1} parent=1 // pred_region
      %79 = dma.done [#allocation10], 2048
    $region41: #{tpu_custom_call.1} parent=1 // pred_fallthru
      _
    %v80 = vld [vmem:[#allocation6] sm:$0xff]
    %v81 = vld [vmem:[#allocation6 + $0x8] sm:$0xff]
    %v82 = vld [vmem:[#allocation6 + $0x10] sm:$0xff]
    %v83 = vld [vmem:[#allocation6 + $0x18] sm:$0xff]
    %v84 = vld [vmem:[#allocation6 + $0x20] sm:$0xff]
    %v85 = vld [vmem:[#allocation6 + $0x28] sm:$0xff]
    %v86 = vld [vmem:[#allocation6 + $0x30] sm:$0xff]
    %v87 = vld [vmem:[#allocation6 + $0x38] sm:$0xff]
    %v88 = vld [vmem:[#allocation6 + $0x40] sm:$0xff]
    %v89 = vld [vmem:[#allocation6 + $0x48] sm:$0xff]
    %v90 = vld [vmem:[#allocation6 + $0x50] sm:$0xff]
    %v91 = vld [vmem:[#allocation6 + $0x58] sm:$0xff]
    %v92 = vld [vmem:[#allocation6 + $0x60] sm:$0xff]
    %v93 = vld [vmem:[#allocation6 + $0x68] sm:$0xff]
    %v94 = vld [vmem:[#allocation6 + $0x70] sm:$0xff]
    %v95 = vld [vmem:[#allocation6 + $0x78] sm:$0xff]
    %v96 = vld [vmem:[#allocation3] sm:$0xff]
    %v97 = vld [vmem:[#allocation3 + $0x8] sm:$0xff]
    %v98 = vld [vmem:[#allocation3 + $0x10] sm:$0xff]
    %v99 = vld [vmem:[#allocation3 + $0x18] sm:$0xff]
    %v100 = vld [vmem:[#allocation3 + $0x20] sm:$0xff]
    %v101 = vld [vmem:[#allocation3 + $0x28] sm:$0xff]
    %v102 = vld [vmem:[#allocation3 + $0x30] sm:$0xff]
    %v103 = vld [vmem:[#allocation3 + $0x38] sm:$0xff]
    %v104 = vld [vmem:[#allocation3 + $0x40] sm:$0xff]
    %v105 = vld [vmem:[#allocation3 + $0x48] sm:$0xff]
    %v106 = vld [vmem:[#allocation3 + $0x50] sm:$0xff]
    %v107 = vld [vmem:[#allocation3 + $0x58] sm:$0xff]
    %v108 = vld [vmem:[#allocation3 + $0x60] sm:$0xff]
    %v109 = vld [vmem:[#allocation3 + $0x68] sm:$0xff]
    %v110 = vld [vmem:[#allocation3 + $0x70] sm:$0xff]
    %v111 = vld [vmem:[#allocation3 + $0x78] sm:$0xff]
    %112 = vmatprep.subr.mxu0 0.0
    %113 = vmatpush1.msra.mxu0 %v80
    %114 = vmatprep.subr.mxu0 0.0
    %115 = vmatpush1.msra.mxu0 %v81
    %116 = vmatprep.subr.mxu0 0.0
    %117 = vmatpush1.msra.mxu0 %v82
    %118 = vmatprep.subr.mxu0 0.0
    %119 = vmatpush1.msra.mxu0 %v83
    %120 = vmatprep.subr.mxu0 0.0
    %121 = vmatpush1.msra.mxu0 %v84
    %122 = vmatprep.subr.mxu0 0.0
    %123 = vmatpush1.msra.mxu0 %v85
    %124 = vmatprep.subr.mxu0 0.0
    %125 = vmatpush1.msra.mxu0 %v86
    %126 = vmatprep.subr.mxu0 0.0
    %127 = vmatpush1.msra.mxu0 %v87
    %128 = vmatprep.subr.mxu0 0.0
    %129 = vmatpush1.msra.mxu0 %v88
    %130 = vmatprep.subr.mxu0 0.0
    %131 = vmatpush1.msra.mxu0 %v89
    %132 = vmatprep.subr.mxu0 0.0
    %133 = vmatpush1.msra.mxu0 %v90
    %134 = vmatprep.subr.mxu0 0.0
    %135 = vmatpush1.msra.mxu0 %v91
    %136 = vmatprep.subr.mxu0 0.0
    %137 = vmatpush1.msra.mxu0 %v92
    %138 = vmatprep.subr.mxu0 0.0
    %139 = vmatpush1.msra.mxu0 %v93
    %140 = vmatprep.subr.mxu0 0.0
    %141 = vmatpush1.msra.mxu0 %v94
    %142 = vmatprep.subr.mxu0 0.0
    %143 = vmatpush1.msra.mxu0 %v95
    %144 = vmatprep.subr.mxu0 0.0
    %145 = vmatpush1.msra.mxu0 0.0
    %146 = vmatprep.subr.mxu0 0.0
    %147 = vmatpush1.msra.mxu0 0.0
    %148 = vmatprep.subr.mxu0 0.0
    %149 = vmatpush1.msra.mxu0 0.0
    %150 = vmatprep.subr.mxu0 0.0
    %151 = vmatpush1.msra.mxu0 0.0
    %152 = vmatprep.subr.mxu0 0.0
    %153 = vmatpush1.msra.mxu0 0.0
    %154 = vmatprep.subr.mxu0 0.0
    %155 = vmatpush1.msra.mxu0 0.0
    %156 = vmatprep.subr.mxu0 0.0
    %157 = vmatpush1.msra.mxu0 0.0
    %158 = vmatprep.subr.mxu0 0.0
    %159 = vmatpush1.msra.mxu0 0.0
    %160 = vmatprep.subr.mxu0 0.0
    %161 = vmatpush1.msra.mxu0 0.0
    %162 = vmatprep.subr.mxu0 0.0
    %163 = vmatpush1.msra.mxu0 0.0
    %164 = vmatprep.subr.mxu0 0.0
    %165 = vmatpush1.msra.mxu0 0.0
    %166 = vmatprep.subr.mxu0 0.0
    %167 = vmatpush1.msra.mxu0 0.0
    %168 = vmatprep.subr.mxu0 0.0
    %169 = vmatpush1.msra.mxu0 0.0
    %170 = vmatprep.subr.mxu0 0.0
    %171 = vmatpush1.msra.mxu0 0.0
    %172 = vmatprep.subr.mxu0 0.0
    %173 = vmatpush1.msra.mxu0 0.0
    %174 = vmatprep.subr.mxu0 0.0
    %175 = vmatpush1.msra.mxu0 0.0
    %176 = vmatprep.mubr.f32.mxu0 0.0
    %177 = vmatmul.mubr.f32.gmra.mrb[0].mxu0 %v96
    %v178 = vpop.f32.mrb[0].mxu0
    %v179 = vadd.f32 0.0, %v178
    %v180 = vpop.f32.mrb[0].mxu0
    %181 = vmatprep.mubr.f32.mxu0 0.0
    %182 = vmatmul.mubr.f32.gmra.mrb[0].mxu0 %v97
    %v183 = vpop.f32.mrb[0].mxu0
    %v184 = vadd.f32 0.0, %v183
    %v185 = vpop.f32.mrb[0].mxu0
    %186 = vmatprep.mubr.f32.mxu0 0.0
    %187 = vmatmul.mubr.f32.gmra.mrb[0].mxu0 %v98
    %v188 = vpop.f32.mrb[0].mxu0
    %v189 = vadd.f32 0.0, %v188
    %v190 = vpop.f32.mrb[0].mxu0
    %191 = vmatprep.mubr.f32.mxu0 0.0
    %192 = vmatmul.mubr.f32.gmra.mrb[0].mxu0 %v99
    %v193 = vpop.f32.mrb[0].mxu0
    %v194 = vadd.f32 0.0, %v193
    %v195 = vpop.f32.mrb[0].mxu0
    %196 = vmatprep.mubr.f32.mxu0 0.0
    %197 = vmatmul.mubr.f32.gmra.mrb[0].mxu0 %v100
    %v198 = vpop.f32.mrb[0].mxu0
    %v199 = vadd.f32 0.0, %v198
    %v200 = vpop.f32.mrb[0].mxu0
    %201 = vmatprep.mubr.f32.mxu0 0.0
    %202 = vmatmul.mubr.f32.gmra.mrb[0].mxu0 %v101
    %v203 = vpop.f32.mrb[0].mxu0
    %v204 = vadd.f32 0.0, %v203
    %v205 = vpop.f32.mrb[0].mxu0
    %206 = vmatprep.mubr.f32.mxu0 0.0
    %207 = vmatmul.mubr.f32.gmra.mrb[0].mxu0 %v102
    %v208 = vpop.f32.mrb[0].mxu0
    %v209 = vadd.f32 0.0, %v208
    %v210 = vpop.f32.mrb[0].mxu0
    %211 = vmatprep.mubr.f32.mxu0 0.0
    %212 = vmatmul.mubr.f32.gmra.mrb[0].mxu0 %v103
    %v213 = vpop.f32.mrb[0].mxu0
    %v214 = vadd.f32 0.0, %v213
    %v215 = vpop.f32.mrb[0].mxu0
    %216 = vmatprep.mubr.f32.mxu0 0.0
    %217 = vmatmul.mubr.f32.gmra.mrb[0].mxu0 %v104
    %v218 = vpop.f32.mrb[0].mxu0
    %v219 = vadd.f32 0.0, %v218
    %v220 = vpop.f32.mrb[0].mxu0
    %221 = vmatprep.mubr.f32.mxu0 0.0
    %222 = vmatmul.mubr.f32.gmra.mrb[0].mxu0 %v105
    %v223 = vpop.f32.mrb[0].mxu0
    %v224 = vadd.f32 0.0, %v223
    %v225 = vpop.f32.mrb[0].mxu0
    %226 = vmatprep.mubr.f32.mxu0 0.0
    %227 = vmatmul.mubr.f32.gmra.mrb[0].mxu0 %v106
    %v228 = vpop.f32.mrb[0].mxu0
    %v229 = vadd.f32 0.0, %v228
    %v230 = vpop.f32.mrb[0].mxu0
    %231 = vmatprep.mubr.f32.mxu0 0.0
    %232 = vmatmul.mubr.f32.gmra.mrb[0].mxu0 %v107
    %v233 = vpop.f32.mrb[0].mxu0
    %v234 = vadd.f32 0.0, %v233
    %v235 = vpop.f32.mrb[0].mxu0
    %236 = vmatprep.mubr.f32.mxu0 0.0
    %237 = vmatmul.mubr.f32.gmra.mrb[0].mxu0 %v108
    %v238 = vpop.f32.mrb[0].mxu0
    %v239 = vadd.f32 0.0, %v238
    %v240 = vpop.f32.mrb[0].mxu0
    %241 = vmatprep.mubr.f32.mxu0 0.0
    %242 = vmatmul.mubr.f32.gmra.mrb[0].mxu0 %v109
    %v243 = vpop.f32.mrb[0].mxu0
    %v244 = vadd.f32 0.0, %v243
    %v245 = vpop.f32.mrb[0].mxu0
    %246 = vmatprep.mubr.f32.mxu0 0.0
    %247 = vmatmul.mubr.f32.gmra.mrb[0].mxu0 %v110
    %v248 = vpop.f32.mrb[0].mxu0
    %v249 = vadd.f32 0.0, %v248
    %v250 = vpop.f32.mrb[0].mxu0
    %251 = vmatprep.mubr.f32.mxu0 0.0
    %252 = vmatmul.mubr.f32.gmra.mrb[0].mxu0 %v111
    %v253 = vpop.f32.mrb[0].mxu0
    %v254 = vadd.f32 0.0, %v253
    %v255 = vpop.f32.mrb[0].mxu0
    %256 = vdwg.mxu0
    %v257 = vld [vmem:[#allocation8] sm:$0xff]
    %v258 = vld [vmem:[#allocation8 + $0x8] sm:$0xff]
    %v259 = vld [vmem:[#allocation8 + $0x10] sm:$0xff]
    %v260 = vld [vmem:[#allocation8 + $0x18] sm:$0xff]
    %v261 = vld [vmem:[#allocation8 + $0x20] sm:$0xff]
    %v262 = vld [vmem:[#allocation8 + $0x28] sm:$0xff]
    %v263 = vld [vmem:[#allocation8 + $0x30] sm:$0xff]
    %v264 = vld [vmem:[#allocation8 + $0x38] sm:$0xff]
    %v265 = vld [vmem:[#allocation8 + $0x40] sm:$0xff]
    %v266 = vld [vmem:[#allocation8 + $0x48] sm:$0xff]
    %v267 = vld [vmem:[#allocation8 + $0x50] sm:$0xff]
    %v268 = vld [vmem:[#allocation8 + $0x58] sm:$0xff]
    %v269 = vld [vmem:[#allocation8 + $0x60] sm:$0xff]
    %v270 = vld [vmem:[#allocation8 + $0x68] sm:$0xff]
    %v271 = vld [vmem:[#allocation8 + $0x70] sm:$0xff]
    %v272 = vld [vmem:[#allocation8 + $0x78] sm:$0xff]
    %v273 = vld [vmem:[%s4] sm:$0x1]
    %v275 = vlaneseq
    %v276 = vshrl.u32 %v275, 7
    %v277 = vsub.s32 0, %v276
    %v278 = vrot.slane %v273, %v277
    %280 = vmatprep.subr.mxu0 0.0
    %281 = vmatpush1.msra.mxu0 %v257
    %282 = vmatprep.subr.mxu0 0.0
    %283 = vmatpush1.msra.mxu0 %v258
    %284 = vmatprep.subr.mxu0 0.0
    %285 = vmatpush1.msra.mxu0 %v259
    %286 = vmatprep.subr.mxu0 0.0
    %287 = vmatpush1.msra.mxu0 %v260
    %288 = vmatprep.subr.mxu0 0.0
    %289 = vmatpush1.msra.mxu0 %v261
    %290 = vmatprep.subr.mxu0 0.0
    %291 = vmatpush1.msra.mxu0 %v262
    %292 = vmatprep.subr.mxu0 0.0
    %293 = vmatpush1.msra.mxu0 %v263
    %294 = vmatprep.subr.mxu0 0.0
    %295 = vmatpush1.msra.mxu0 %v264
    %296 = vmatprep.subr.mxu0 0.0
    %297 = vmatpush1.msra.mxu0 %v265
    %298 = vmatprep.subr.mxu0 0.0
    %299 = vmatpush1.msra.mxu0 %v266
    %300 = vmatprep.subr.mxu0 0.0
    %301 = vmatpush1.msra.mxu0 %v267
    %302 = vmatprep.subr.mxu0 0.0
    %303 = vmatpush1.msra.mxu0 %v268
    %304 = vmatprep.subr.mxu0 0.0
    %305 = vmatpush1.msra.mxu0 %v269
    %306 = vmatprep.subr.mxu0 0.0
    %307 = vmatpush1.msra.mxu0 %v270
    %308 = vmatprep.subr.mxu0 0.0
    %309 = vmatpush1.msra.mxu0 %v271
    %310 = vmatprep.subr.mxu0 0.0
    %311 = vmatpush1.msra.mxu0 %v272
    %312 = vmatprep.subr.mxu0 0.0
    %313 = vmatpush1.msra.mxu0 0.0
    %314 = vmatprep.subr.mxu0 0.0
    %315 = vmatpush1.msra.mxu0 0.0
    %316 = vmatprep.subr.mxu0 0.0
    %317 = vmatpush1.msra.mxu0 0.0
    %318 = vmatprep.subr.mxu0 0.0
    %319 = vmatpush1.msra.mxu0 0.0
    %320 = vmatprep.subr.mxu0 0.0
    %321 = vmatpush1.msra.mxu0 0.0
    %322 = vmatprep.subr.mxu0 0.0
    %323 = vmatpush1.msra.mxu0 0.0
    %324 = vmatprep.subr.mxu0 0.0
    %325 = vmatpush1.msra.mxu0 0.0
    %326 = vmatprep.subr.mxu0 0.0
    %327 = vmatpush1.msra.mxu0 0.0
    %328 = vmatprep.subr.mxu0 0.0
    %329 = vmatpush1.msra.mxu0 0.0
    %330 = vmatprep.subr.mxu0 0.0
    %331 = vmatpush1.msra.mxu0 0.0
    %332 = vmatprep.subr.mxu0 0.0
    %333 = vmatpush1.msra.mxu0 0.0
    %334 = vmatprep.subr.mxu0 0.0
    %335 = vmatpush1.msra.mxu0 0.0
    %336 = vmatprep.subr.mxu0 0.0
    %337 = vmatpush1.msra.mxu0 0.0
    %338 = vmatprep.subr.mxu0 0.0
    %339 = vmatpush1.msra.mxu0 0.0
    %340 = vmatprep.subr.mxu0 0.0
    %341 = vmatpush1.msra.mxu0 0.0
    %342 = vmatprep.subr.mxu0 0.0
    %343 = vmatpush1.msra.mxu0 0.0
    %344 = vmatprep.mubr.f32.mxu0 0.0
    %345 = vmatmul.mubr.f32.gmra.mrb[0].mxu0 %v179
    %v346 = vpop.f32.mrb[0].mxu0
    %v347 = vadd.f32 %v278, %v346
    %v348 = vpop.f32.mrb[0].mxu0
    %349 = vmatprep.mubr.f32.mxu0 0.0
    %350 = vmatmul.mubr.f32.gmra.mrb[0].mxu0 %v184
    %v351 = vpop.f32.mrb[0].mxu0
    %v352 = vadd.f32 %v278, %v351
    %v353 = vpop.f32.mrb[0].mxu0
    %354 = vmatprep.mubr.f32.mxu0 0.0
    %355 = vmatmul.mubr.f32.gmra.mrb[0].mxu0 %v189
    %v356 = vpop.f32.mrb[0].mxu0
    %v357 = vadd.f32 %v278, %v356
    %v358 = vpop.f32.mrb[0].mxu0
    %359 = vmatprep.mubr.f32.mxu0 0.0
    %360 = vmatmul.mubr.f32.gmra.mrb[0].mxu0 %v194
    %v361 = vpop.f32.mrb[0].mxu0
    %v362 = vadd.f32 %v278, %v361
    %v363 = vpop.f32.mrb[0].mxu0
    %364 = vmatprep.mubr.f32.mxu0 0.0
    %365 = vmatmul.mubr.f32.gmra.mrb[0].mxu0 %v199
    %v366 = vpop.f32.mrb[0].mxu0
    %v367 = vadd.f32 %v278, %v366
    %v368 = vpop.f32.mrb[0].mxu0
    %369 = vmatprep.mubr.f32.mxu0 0.0
    %370 = vmatmul.mubr.f32.gmra.mrb[0].mxu0 %v204
    %v371 = vpop.f32.mrb[0].mxu0
    %v372 = vadd.f32 %v278, %v371
    %v373 = vpop.f32.mrb[0].mxu0
    %374 = vmatprep.mubr.f32.mxu0 0.0
    %375 = vmatmul.mubr.f32.gmra.mrb[0].mxu0 %v209
    %v376 = vpop.f32.mrb[0].mxu0
    %v377 = vadd.f32 %v278, %v376
    %v378 = vpop.f32.mrb[0].mxu0
    %379 = vmatprep.mubr.f32.mxu0 0.0
    %380 = vmatmul.mubr.f32.gmra.mrb[0].mxu0 %v214
    %v381 = vpop.f32.mrb[0].mxu0
    %v382 = vadd.f32 %v278, %v381
    %v383 = vpop.f32.mrb[0].mxu0
    %384 = vmatprep.mubr.f32.mxu0 0.0
    %385 = vmatmul.mubr.f32.gmra.mrb[0].mxu0 %v219
    %v386 = vpop.f32.mrb[0].mxu0
    %v387 = vadd.f32 %v278, %v386
    %v388 = vpop.f32.mrb[0].mxu0
    %389 = vmatprep.mubr.f32.mxu0 0.0
    %390 = vmatmul.mubr.f32.gmra.mrb[0].mxu0 %v224
    %v391 = vpop.f32.mrb[0].mxu0
    %v392 = vadd.f32 %v278, %v391
    %v393 = vpop.f32.mrb[0].mxu0
    %394 = vmatprep.mubr.f32.mxu0 0.0
    %395 = vmatmul.mubr.f32.gmra.mrb[0].mxu0 %v229
    %v396 = vpop.f32.mrb[0].mxu0
    %v397 = vadd.f32 %v278, %v396
    %v398 = vpop.f32.mrb[0].mxu0
    %399 = vmatprep.mubr.f32.mxu0 0.0
    %400 = vmatmul.mubr.f32.gmra.mrb[0].mxu0 %v234
    %v401 = vpop.f32.mrb[0].mxu0
    %v402 = vadd.f32 %v278, %v401
    %v403 = vpop.f32.mrb[0].mxu0
    %404 = vmatprep.mubr.f32.mxu0 0.0
    %405 = vmatmul.mubr.f32.gmra.mrb[0].mxu0 %v239
    %v406 = vpop.f32.mrb[0].mxu0
    %v407 = vadd.f32 %v278, %v406
    %v408 = vpop.f32.mrb[0].mxu0
    %409 = vmatprep.mubr.f32.mxu0 0.0
    %410 = vmatmul.mubr.f32.gmra.mrb[0].mxu0 %v244
    %v411 = vpop.f32.mrb[0].mxu0
    %v412 = vadd.f32 %v278, %v411
    %v413 = vpop.f32.mrb[0].mxu0
    %414 = vmatprep.mubr.f32.mxu0 0.0
    %415 = vmatmul.mubr.f32.gmra.mrb[0].mxu0 %v249
    %v416 = vpop.f32.mrb[0].mxu0
    %v417 = vadd.f32 %v278, %v416
    %v418 = vpop.f32.mrb[0].mxu0
    %419 = vmatprep.mubr.f32.mxu0 0.0
    %420 = vmatmul.mubr.f32.gmra.mrb[0].mxu0 %v254
    %v421 = vpop.f32.mrb[0].mxu0
    %v422 = vadd.f32 %v278, %v421
    %v423 = vpop.f32.mrb[0].mxu0
    %424 = vdwg.mxu0
    %v425 = vmax.f32 %v347, 0.0
    %v426 = vmax.f32 %v352, 0.0
    %v427 = vmax.f32 %v357, 0.0
    %v428 = vmax.f32 %v362, 0.0
    %v429 = vmax.f32 %v367, 0.0
    %v430 = vmax.f32 %v372, 0.0
    %v431 = vmax.f32 %v377, 0.0
    %v432 = vmax.f32 %v382, 0.0
    %v433 = vmax.f32 %v387, 0.0
    %v434 = vmax.f32 %v392, 0.0
    %v435 = vmax.f32 %v397, 0.0
    %v436 = vmax.f32 %v402, 0.0
    %v437 = vmax.f32 %v407, 0.0
    %v438 = vmax.f32 %v412, 0.0
    %v439 = vmax.f32 %v417, 0.0
    %v440 = vmax.f32 %v422, 0.0
    %441 = vmatprep.subr.mxu0 0.0
    %442 = vmatpush1.msra.mxu0 %v425
    %443 = vmatprep.subr.mxu0 0.0
    %444 = vmatpush1.msra.mxu0 %v426
    %445 = vmatprep.subr.mxu0 0.0
    %446 = vmatpush1.msra.mxu0 %v427
    %447 = vmatprep.subr.mxu0 0.0
    %448 = vmatpush1.msra.mxu0 %v428
    %449 = vmatprep.subr.mxu0 0.0
    %450 = vmatpush1.msra.mxu0 %v429
    %451 = vmatprep.subr.mxu0 0.0
    %452 = vmatpush1.msra.mxu0 %v430
    %453 = vmatprep.subr.mxu0 0.0
    %454 = vmatpush1.msra.mxu0 %v431
    %455 = vmatprep.subr.mxu0 0.0
    %456 = vmatpush1.msra.mxu0 %v432
    %457 = vmatprep.subr.mxu0 0.0
    %458 = vmatpush1.msra.mxu0 %v433
    %459 = vmatprep.subr.mxu0 0.0
    %460 = vmatpush1.msra.mxu0 %v434
    %461 = vmatprep.subr.mxu0 0.0
    %462 = vmatpush1.msra.mxu0 %v435
    %463 = vmatprep.subr.mxu0 0.0
    %464 = vmatpush1.msra.mxu0 %v436
    %465 = vmatprep.subr.mxu0 0.0
    %466 = vmatpush1.msra.mxu0 %v437
    %467 = vmatprep.subr.mxu0 0.0
    %468 = vmatpush1.msra.mxu0 %v438
    %469 = vmatprep.subr.mxu0 0.0
    %470 = vmatpush1.msra.mxu0 %v439
    %471 = vmatprep.subr.mxu0 0.0
    %472 = vmatpush1.msra.mxu0 %v440
    %473 = vmatprep.subr.mxu0 0.0
    %474 = vmatpush1.msra.mxu0 0.0
    %475 = vmatprep.subr.mxu0 0.0
    %476 = vmatpush1.msra.mxu0 0.0
    %477 = vmatprep.subr.mxu0 0.0
    %478 = vmatpush1.msra.mxu0 0.0
    %479 = vmatprep.subr.mxu0 0.0
    %480 = vmatpush1.msra.mxu0 0.0
    %481 = vmatprep.subr.mxu0 0.0
    %482 = vmatpush1.msra.mxu0 0.0
    %483 = vmatprep.subr.mxu0 0.0
    %484 = vmatpush1.msra.mxu0 0.0
    %485 = vmatprep.subr.mxu0 0.0
    %486 = vmatpush1.msra.mxu0 0.0
    %487 = vmatprep.subr.mxu0 0.0
    %488 = vmatpush1.msra.mxu0 0.0
    %489 = vmatprep.subr.mxu0 0.0
    %490 = vmatpush1.msra.mxu0 0.0
    %491 = vmatprep.subr.mxu0 0.0
    %492 = vmatpush1.msra.mxu0 0.0
    %493 = vmatprep.subr.mxu0 0.0
    %494 = vmatpush1.msra.mxu0 0.0
    %495 = vmatprep.subr.mxu0 0.0
    %496 = vmatpush1.msra.mxu0 0.0
    %497 = vmatprep.subr.mxu0 0.0
    %498 = vmatpush1.msra.mxu0 0.0
    %499 = vmatprep.subr.mxu0 0.0
    %500 = vmatpush1.msra.mxu0 0.0
    %501 = vmatprep.subr.mxu0 0.0
    %502 = vmatpush1.msra.mxu0 0.0
    %503 = vmatprep.subr.mxu0 0.0
    %504 = vmatpush1.msra.mxu0 0.0
    %505 = vmatprep.mubr.f32.mxu0 0.0
    %506 = vmatmul.mubr.f32.gmra.mrb[0].mxu0 %v96
    %v507 = vpop.f32.mrb[0].mxu0
    %v508 = vadd.f32 0.0, %v507
    %v509 = vpop.f32.mrb[0].mxu0
    %510 = vmatprep.mubr.f32.mxu0 0.0
    %511 = vmatmul.mubr.f32.gmra.mrb[0].mxu0 %v97
    %v512 = vpop.f32.mrb[0].mxu0
    %v513 = vadd.f32 0.0, %v512
    %v514 = vpop.f32.mrb[0].mxu0
    %515 = vmatprep.mubr.f32.mxu0 0.0
    %516 = vmatmul.mubr.f32.gmra.mrb[0].mxu0 %v98
    %v517 = vpop.f32.mrb[0].mxu0
    %v518 = vadd.f32 0.0, %v517
    %v519 = vpop.f32.mrb[0].mxu0
    %520 = vmatprep.mubr.f32.mxu0 0.0
    %521 = vmatmul.mubr.f32.gmra.mrb[0].mxu0 %v99
    %v522 = vpop.f32.mrb[0].mxu0
    %v523 = vadd.f32 0.0, %v522
    %v524 = vpop.f32.mrb[0].mxu0
    %525 = vmatprep.mubr.f32.mxu0 0.0
    %526 = vmatmul.mubr.f32.gmra.mrb[0].mxu0 %v100
    %v527 = vpop.f32.mrb[0].mxu0
    %v528 = vadd.f32 0.0, %v527
    %v529 = vpop.f32.mrb[0].mxu0
    %530 = vmatprep.mubr.f32.mxu0 0.0
    %531 = vmatmul.mubr.f32.gmra.mrb[0].mxu0 %v101
    %v532 = vpop.f32.mrb[0].mxu0
    %v533 = vadd.f32 0.0, %v532
    %v534 = vpop.f32.mrb[0].mxu0
    %535 = vmatprep.mubr.f32.mxu0 0.0
    %536 = vmatmul.mubr.f32.gmra.mrb[0].mxu0 %v102
    %v537 = vpop.f32.mrb[0].mxu0
    %v538 = vadd.f32 0.0, %v537
    %v539 = vpop.f32.mrb[0].mxu0
    %540 = vmatprep.mubr.f32.mxu0 0.0
    %541 = vmatmul.mubr.f32.gmra.mrb[0].mxu0 %v103
    %v542 = vpop.f32.mrb[0].mxu0
    %v543 = vadd.f32 0.0, %v542
    %v544 = vpop.f32.mrb[0].mxu0
    %545 = vmatprep.mubr.f32.mxu0 0.0
    %546 = vmatmul.mubr.f32.gmra.mrb[0].mxu0 %v104
    %v547 = vpop.f32.mrb[0].mxu0
    %v548 = vadd.f32 0.0, %v547
    %v549 = vpop.f32.mrb[0].mxu0
    %550 = vmatprep.mubr.f32.mxu0 0.0
    %551 = vmatmul.mubr.f32.gmra.mrb[0].mxu0 %v105
    %v552 = vpop.f32.mrb[0].mxu0
    %v553 = vadd.f32 0.0, %v552
    %v554 = vpop.f32.mrb[0].mxu0
    %555 = vmatprep.mubr.f32.mxu0 0.0
    %556 = vmatmul.mubr.f32.gmra.mrb[0].mxu0 %v106
    %v557 = vpop.f32.mrb[0].mxu0
    %v558 = vadd.f32 0.0, %v557
    %v559 = vpop.f32.mrb[0].mxu0
    %560 = vmatprep.mubr.f32.mxu0 0.0
    %561 = vmatmul.mubr.f32.gmra.mrb[0].mxu0 %v107
    %v562 = vpop.f32.mrb[0].mxu0
    %v563 = vadd.f32 0.0, %v562
    %v564 = vpop.f32.mrb[0].mxu0
    %565 = vmatprep.mubr.f32.mxu0 0.0
    %566 = vmatmul.mubr.f32.gmra.mrb[0].mxu0 %v108
    %v567 = vpop.f32.mrb[0].mxu0
    %v568 = vadd.f32 0.0, %v567
    %v569 = vpop.f32.mrb[0].mxu0
    %570 = vmatprep.mubr.f32.mxu0 0.0
    %571 = vmatmul.mubr.f32.gmra.mrb[0].mxu0 %v109
    %v572 = vpop.f32.mrb[0].mxu0
    %v573 = vadd.f32 0.0, %v572
    %v574 = vpop.f32.mrb[0].mxu0
    %575 = vmatprep.mubr.f32.mxu0 0.0
    %576 = vmatmul.mubr.f32.gmra.mrb[0].mxu0 %v110
    %v577 = vpop.f32.mrb[0].mxu0
    %v578 = vadd.f32 0.0, %v577
    %v579 = vpop.f32.mrb[0].mxu0
    %580 = vmatprep.mubr.f32.mxu0 0.0
    %581 = vmatmul.mubr.f32.gmra.mrb[0].mxu0 %v111
    %v582 = vpop.f32.mrb[0].mxu0
    %v583 = vadd.f32 0.0, %v582
    %v584 = vpop.f32.mrb[0].mxu0
    %585 = vdwg.mxu0
    %s586 = scalar_lea.vmem [#allocation8], 128
    %v587 = vld [vmem:[%s586] sm:$0xff]
    %v588 = vld [vmem:[%s586 + $0x8] sm:$0xff]
    %v589 = vld [vmem:[%s586 + $0x10] sm:$0xff]
    %v590 = vld [vmem:[%s586 + $0x18] sm:$0xff]
    %v591 = vld [vmem:[%s586 + $0x20] sm:$0xff]
    %v592 = vld [vmem:[%s586 + $0x28] sm:$0xff]
    %v593 = vld [vmem:[%s586 + $0x30] sm:$0xff]
    %v594 = vld [vmem:[%s586 + $0x38] sm:$0xff]
    %v595 = vld [vmem:[%s586 + $0x40] sm:$0xff]
    %v596 = vld [vmem:[%s586 + $0x48] sm:$0xff]
    %v597 = vld [vmem:[%s586 + $0x50] sm:$0xff]
    %v598 = vld [vmem:[%s586 + $0x58] sm:$0xff]
    %v599 = vld [vmem:[%s586 + $0x60] sm:$0xff]
    %v600 = vld [vmem:[%s586 + $0x68] sm:$0xff]
    %v601 = vld [vmem:[%s586 + $0x70] sm:$0xff]
    %v602 = vld [vmem:[%s586 + $0x78] sm:$0xff]
    %s603 = scalar_lea.vmem %s4, 1
    %v604 = vld [vmem:[%s603] sm:$0x1]
    %v606 = vlaneseq
    %v607 = vshrl.u32 %v606, 7
    %v608 = vsub.s32 0, %v607
    %v609 = vrot.slane %v604, %v608
    %611 = vmatprep.subr.mxu0 0.0
    %612 = vmatpush1.msra.mxu0 %v587
    %613 = vmatprep.subr.mxu0 0.0
    %614 = vmatpush1.msra.mxu0 %v588
    %615 = vmatprep.subr.mxu0 0.0
    %616 = vmatpush1.msra.mxu0 %v589
    %617 = vmatprep.subr.mxu0 0.0
    %618 = vmatpush1.msra.mxu0 %v590
    %619 = vmatprep.subr.mxu0 0.0
    %620 = vmatpush1.msra.mxu0 %v591
    %621 = vmatprep.subr.mxu0 0.0
    %622 = vmatpush1.msra.mxu0 %v592
    %623 = vmatprep.subr.mxu0 0.0
    %624 = vmatpush1.msra.mxu0 %v593
    %625 = vmatprep.subr.mxu0 0.0
    %626 = vmatpush1.msra.mxu0 %v594
    %627 = vmatprep.subr.mxu0 0.0
    %628 = vmatpush1.msra.mxu0 %v595
    %629 = vmatprep.subr.mxu0 0.0
    %630 = vmatpush1.msra.mxu0 %v596
    %631 = vmatprep.subr.mxu0 0.0
    %632 = vmatpush1.msra.mxu0 %v597
    %633 = vmatprep.subr.mxu0 0.0
    %634 = vmatpush1.msra.mxu0 %v598
    %635 = vmatprep.subr.mxu0 0.0
    %636 = vmatpush1.msra.mxu0 %v599
    %637 = vmatprep.subr.mxu0 0.0
    %638 = vmatpush1.msra.mxu0 %v600
    %639 = vmatprep.subr.mxu0 0.0
    %640 = vmatpush1.msra.mxu0 %v601
    %641 = vmatprep.subr.mxu0 0.0
    %642 = vmatpush1.msra.mxu0 %v602
    %643 = vmatprep.subr.mxu0 0.0
    %644 = vmatpush1.msra.mxu0 0.0
    %645 = vmatprep.subr.mxu0 0.0
    %646 = vmatpush1.msra.mxu0 0.0
    %647 = vmatprep.subr.mxu0 0.0
    %648 = vmatpush1.msra.mxu0 0.0
    %649 = vmatprep.subr.mxu0 0.0
    %650 = vmatpush1.msra.mxu0 0.0
    %651 = vmatprep.subr.mxu0 0.0
    %652 = vmatpush1.msra.mxu0 0.0
    %653 = vmatprep.subr.mxu0 0.0
    %654 = vmatpush1.msra.mxu0 0.0
    %655 = vmatprep.subr.mxu0 0.0
    %656 = vmatpush1.msra.mxu0 0.0
    %657 = vmatprep.subr.mxu0 0.0
    %658 = vmatpush1.msra.mxu0 0.0
    %659 = vmatprep.subr.mxu0 0.0
    %660 = vmatpush1.msra.mxu0 0.0
    %661 = vmatprep.subr.mxu0 0.0
    %662 = vmatpush1.msra.mxu0 0.0
    %663 = vmatprep.subr.mxu0 0.0
    %664 = vmatpush1.msra.mxu0 0.0
    %665 = vmatprep.subr.mxu0 0.0
    %666 = vmatpush1.msra.mxu0 0.0
    %667 = vmatprep.subr.mxu0 0.0
    %668 = vmatpush1.msra.mxu0 0.0
    %669 = vmatprep.subr.mxu0 0.0
    %670 = vmatpush1.msra.mxu0 0.0
    %671 = vmatprep.subr.mxu0 0.0
    %672 = vmatpush1.msra.mxu0 0.0
    %673 = vmatprep.subr.mxu0 0.0
    %674 = vmatpush1.msra.mxu0 0.0
    %675 = vmatprep.mubr.f32.mxu0 0.0
    %676 = vmatmul.mubr.f32.gmra.mrb[0].mxu0 %v508
    %v677 = vpop.f32.mrb[0].mxu0
    %v678 = vadd.f32 %v609, %v677
    %v679 = vpop.f32.mrb[0].mxu0
    %680 = vmatprep.mubr.f32.mxu0 0.0
    %681 = vmatmul.mubr.f32.gmra.mrb[0].mxu0 %v513
    %v682 = vpop.f32.mrb[0].mxu0
    %v683 = vadd.f32 %v609, %v682
    %v684 = vpop.f32.mrb[0].mxu0
    %685 = vmatprep.mubr.f32.mxu0 0.0
    %686 = vmatmul.mubr.f32.gmra.mrb[0].mxu0 %v518
    %v687 = vpop.f32.mrb[0].mxu0
    %v688 = vadd.f32 %v609, %v687
    %v689 = vpop.f32.mrb[0].mxu0
    %690 = vmatprep.mubr.f32.mxu0 0.0
    %691 = vmatmul.mubr.f32.gmra.mrb[0].mxu0 %v523
    %v692 = vpop.f32.mrb[0].mxu0
    %v693 = vadd.f32 %v609, %v692
    %v694 = vpop.f32.mrb[0].mxu0
    %695 = vmatprep.mubr.f32.mxu0 0.0
    %696 = vmatmul.mubr.f32.gmra.mrb[0].mxu0 %v528
    %v697 = vpop.f32.mrb[0].mxu0
    %v698 = vadd.f32 %v609, %v697
    %v699 = vpop.f32.mrb[0].mxu0
    %700 = vmatprep.mubr.f32.mxu0 0.0
    %701 = vmatmul.mubr.f32.gmra.mrb[0].mxu0 %v533
    %v702 = vpop.f32.mrb[0].mxu0
    %v703 = vadd.f32 %v609, %v702
    %v704 = vpop.f32.mrb[0].mxu0
    %705 = vmatprep.mubr.f32.mxu0 0.0
    %706 = vmatmul.mubr.f32.gmra.mrb[0].mxu0 %v538
    %v707 = vpop.f32.mrb[0].mxu0
    %v708 = vadd.f32 %v609, %v707
    %v709 = vpop.f32.mrb[0].mxu0
    %710 = vmatprep.mubr.f32.mxu0 0.0
    %711 = vmatmul.mubr.f32.gmra.mrb[0].mxu0 %v543
    %v712 = vpop.f32.mrb[0].mxu0
    %v713 = vadd.f32 %v609, %v712
    %v714 = vpop.f32.mrb[0].mxu0
    %715 = vmatprep.mubr.f32.mxu0 0.0
    %716 = vmatmul.mubr.f32.gmra.mrb[0].mxu0 %v548
    %v717 = vpop.f32.mrb[0].mxu0
    %v718 = vadd.f32 %v609, %v717
    %v719 = vpop.f32.mrb[0].mxu0
    %720 = vmatprep.mubr.f32.mxu0 0.0
    %721 = vmatmul.mubr.f32.gmra.mrb[0].mxu0 %v553
    %v722 = vpop.f32.mrb[0].mxu0
    %v723 = vadd.f32 %v609, %v722
    %v724 = vpop.f32.mrb[0].mxu0
    %725 = vmatprep.mubr.f32.mxu0 0.0
    %726 = vmatmul.mubr.f32.gmra.mrb[0].mxu0 %v558
    %v727 = vpop.f32.mrb[0].mxu0
    %v728 = vadd.f32 %v609, %v727
    %v729 = vpop.f32.mrb[0].mxu0
    %730 = vmatprep.mubr.f32.mxu0 0.0
    %731 = vmatmul.mubr.f32.gmra.mrb[0].mxu0 %v563
    %v732 = vpop.f32.mrb[0].mxu0
    %v733 = vadd.f32 %v609, %v732
    %v734 = vpop.f32.mrb[0].mxu0
    %735 = vmatprep.mubr.f32.mxu0 0.0
    %736 = vmatmul.mubr.f32.gmra.mrb[0].mxu0 %v568
    %v737 = vpop.f32.mrb[0].mxu0
    %v738 = vadd.f32 %v609, %v737
    %v739 = vpop.f32.mrb[0].mxu0
    %740 = vmatprep.mubr.f32.mxu0 0.0
    %741 = vmatmul.mubr.f32.gmra.mrb[0].mxu0 %v573
    %v742 = vpop.f32.mrb[0].mxu0
    %v743 = vadd.f32 %v609, %v742
    %v744 = vpop.f32.mrb[0].mxu0
    %745 = vmatprep.mubr.f32.mxu0 0.0
    %746 = vmatmul.mubr.f32.gmra.mrb[0].mxu0 %v578
    %v747 = vpop.f32.mrb[0].mxu0
    %v748 = vadd.f32 %v609, %v747
    %v749 = vpop.f32.mrb[0].mxu0
    %750 = vmatprep.mubr.f32.mxu0 0.0
    %751 = vmatmul.mubr.f32.gmra.mrb[0].mxu0 %v583
    %v752 = vpop.f32.mrb[0].mxu0
    %v753 = vadd.f32 %v609, %v752
    %v754 = vpop.f32.mrb[0].mxu0
    %755 = vdwg.mxu0
    %v756 = vmax.f32 %v678, 0.0
    %v757 = vmax.f32 %v683, 0.0
    %v758 = vmax.f32 %v688, 0.0
    %v759 = vmax.f32 %v693, 0.0
    %v760 = vmax.f32 %v698, 0.0
    %v761 = vmax.f32 %v703, 0.0
    %v762 = vmax.f32 %v708, 0.0
    %v763 = vmax.f32 %v713, 0.0
    %v764 = vmax.f32 %v718, 0.0
    %v765 = vmax.f32 %v723, 0.0
    %v766 = vmax.f32 %v728, 0.0
    %v767 = vmax.f32 %v733, 0.0
    %v768 = vmax.f32 %v738, 0.0
    %v769 = vmax.f32 %v743, 0.0
    %v770 = vmax.f32 %v748, 0.0
    %v771 = vmax.f32 %v753, 0.0
    %772 = vmatprep.subr.mxu0 0.0
    %773 = vmatpush1.msra.mxu0 %v756
    %774 = vmatprep.subr.mxu0 0.0
    %775 = vmatpush1.msra.mxu0 %v757
    %776 = vmatprep.subr.mxu0 0.0
    %777 = vmatpush1.msra.mxu0 %v758
    %778 = vmatprep.subr.mxu0 0.0
    %779 = vmatpush1.msra.mxu0 %v759
    %780 = vmatprep.subr.mxu0 0.0
    %781 = vmatpush1.msra.mxu0 %v760
    %782 = vmatprep.subr.mxu0 0.0
    %783 = vmatpush1.msra.mxu0 %v761
    %784 = vmatprep.subr.mxu0 0.0
    %785 = vmatpush1.msra.mxu0 %v762
    %786 = vmatprep.subr.mxu0 0.0
    %787 = vmatpush1.msra.mxu0 %v763
    %788 = vmatprep.subr.mxu0 0.0
    %789 = vmatpush1.msra.mxu0 %v764
    %790 = vmatprep.subr.mxu0 0.0
    %791 = vmatpush1.msra.mxu0 %v765
    %792 = vmatprep.subr.mxu0 0.0
    %793 = vmatpush1.msra.mxu0 %v766
    %794 = vmatprep.subr.mxu0 0.0
    %795 = vmatpush1.msra.mxu0 %v767
    %796 = vmatprep.subr.mxu0 0.0
    %797 = vmatpush1.msra.mxu0 %v768
    %798 = vmatprep.subr.mxu0 0.0
    %799 = vmatpush1.msra.mxu0 %v769
    %800 = vmatprep.subr.mxu0 0.0
    %801 = vmatpush1.msra.mxu0 %v770
    %802 = vmatprep.subr.mxu0 0.0
    %803 = vmatpush1.msra.mxu0 %v771
    %804 = vmatprep.subr.mxu0 0.0
    %805 = vmatpush1.msra.mxu0 0.0
    %806 = vmatprep.subr.mxu0 0.0
    %807 = vmatpush1.msra.mxu0 0.0
    %808 = vmatprep.subr.mxu0 0.0
    %809 = vmatpush1.msra.mxu0 0.0
    %810 = vmatprep.subr.mxu0 0.0
    %811 = vmatpush1.msra.mxu0 0.0
    %812 = vmatprep.subr.mxu0 0.0
    %813 = vmatpush1.msra.mxu0 0.0
    %814 = vmatprep.subr.mxu0 0.0
    %815 = vmatpush1.msra.mxu0 0.0
    %816 = vmatprep.subr.mxu0 0.0
    %817 = vmatpush1.msra.mxu0 0.0
    %818 = vmatprep.subr.mxu0 0.0
    %819 = vmatpush1.msra.mxu0 0.0
    %820 = vmatprep.subr.mxu0 0.0
    %821 = vmatpush1.msra.mxu0 0.0
    %822 = vmatprep.subr.mxu0 0.0
    %823 = vmatpush1.msra.mxu0 0.0
    %824 = vmatprep.subr.mxu0 0.0
    %825 = vmatpush1.msra.mxu0 0.0
    %826 = vmatprep.subr.mxu0 0.0
    %827 = vmatpush1.msra.mxu0 0.0
    %828 = vmatprep.subr.mxu0 0.0
    %829 = vmatpush1.msra.mxu0 0.0
    %830 = vmatprep.subr.mxu0 0.0
    %831 = vmatpush1.msra.mxu0 0.0
    %832 = vmatprep.subr.mxu0 0.0
    %833 = vmatpush1.msra.mxu0 0.0
    %834 = vmatprep.subr.mxu0 0.0
    %835 = vmatpush1.msra.mxu0 0.0
    %836 = vmatprep.mubr.f32.mxu0 0.0
    %837 = vmatmul.mubr.f32.gmra.mrb[0].mxu0 %v96
    %v838 = vpop.f32.mrb[0].mxu0
    %v839 = vadd.f32 0.0, %v838
    %v840 = vpop.f32.mrb[0].mxu0
    %841 = vmatprep.mubr.f32.mxu0 0.0
    %842 = vmatmul.mubr.f32.gmra.mrb[0].mxu0 %v97
    %v843 = vpop.f32.mrb[0].mxu0
    %v844 = vadd.f32 0.0, %v843
    %v845 = vpop.f32.mrb[0].mxu0
    %846 = vmatprep.mubr.f32.mxu0 0.0
    %847 = vmatmul.mubr.f32.gmra.mrb[0].mxu0 %v98
    %v848 = vpop.f32.mrb[0].mxu0
    %v849 = vadd.f32 0.0, %v848
    %v850 = vpop.f32.mrb[0].mxu0
    %851 = vmatprep.mubr.f32.mxu0 0.0
    %852 = vmatmul.mubr.f32.gmra.mrb[0].mxu0 %v99
    %v853 = vpop.f32.mrb[0].mxu0
    %v854 = vadd.f32 0.0, %v853
    %v855 = vpop.f32.mrb[0].mxu0
    %856 = vmatprep.mubr.f32.mxu0 0.0
    %857 = vmatmul.mubr.f32.gmra.mrb[0].mxu0 %v100
    %v858 = vpop.f32.mrb[0].mxu0
    %v859 = vadd.f32 0.0, %v858
    %v860 = vpop.f32.mrb[0].mxu0
    %861 = vmatprep.mubr.f32.mxu0 0.0
    %862 = vmatmul.mubr.f32.gmra.mrb[0].mxu0 %v101
    %v863 = vpop.f32.mrb[0].mxu0
    %v864 = vadd.f32 0.0, %v863
    %v865 = vpop.f32.mrb[0].mxu0
    %866 = vmatprep.mubr.f32.mxu0 0.0
    %867 = vmatmul.mubr.f32.gmra.mrb[0].mxu0 %v102
    %v868 = vpop.f32.mrb[0].mxu0
    %v869 = vadd.f32 0.0, %v868
    %v870 = vpop.f32.mrb[0].mxu0
    %871 = vmatprep.mubr.f32.mxu0 0.0
    %872 = vmatmul.mubr.f32.gmra.mrb[0].mxu0 %v103
    %v873 = vpop.f32.mrb[0].mxu0
    %v874 = vadd.f32 0.0, %v873
    %v875 = vpop.f32.mrb[0].mxu0
    %876 = vmatprep.mubr.f32.mxu0 0.0
    %877 = vmatmul.mubr.f32.gmra.mrb[0].mxu0 %v104
    %v878 = vpop.f32.mrb[0].mxu0
    %v879 = vadd.f32 0.0, %v878
    %v880 = vpop.f32.mrb[0].mxu0
    %881 = vmatprep.mubr.f32.mxu0 0.0
    %882 = vmatmul.mubr.f32.gmra.mrb[0].mxu0 %v105
    %v883 = vpop.f32.mrb[0].mxu0
    %v884 = vadd.f32 0.0, %v883
    %v885 = vpop.f32.mrb[0].mxu0
    %886 = vmatprep.mubr.f32.mxu0 0.0
    %887 = vmatmul.mubr.f32.gmra.mrb[0].mxu0 %v106
    %v888 = vpop.f32.mrb[0].mxu0
    %v889 = vadd.f32 0.0, %v888
    %v890 = vpop.f32.mrb[0].mxu0
    %891 = vmatprep.mubr.f32.mxu0 0.0
    %892 = vmatmul.mubr.f32.gmra.mrb[0].mxu0 %v107
    %v893 = vpop.f32.mrb[0].mxu0
    %v894 = vadd.f32 0.0, %v893
    %v895 = vpop.f32.mrb[0].mxu0
    %896 = vmatprep.mubr.f32.mxu0 0.0
    %897 = vmatmul.mubr.f32.gmra.mrb[0].mxu0 %v108
    %v898 = vpop.f32.mrb[0].mxu0
    %v899 = vadd.f32 0.0, %v898
    %v900 = vpop.f32.mrb[0].mxu0
    %901 = vmatprep.mubr.f32.mxu0 0.0
    %902 = vmatmul.mubr.f32.gmra.mrb[0].mxu0 %v109
    %v903 = vpop.f32.mrb[0].mxu0
    %v904 = vadd.f32 0.0, %v903
    %v905 = vpop.f32.mrb[0].mxu0
    %906 = vmatprep.mubr.f32.mxu0 0.0
    %907 = vmatmul.mubr.f32.gmra.mrb[0].mxu0 %v110
    %v908 = vpop.f32.mrb[0].mxu0
    %v909 = vadd.f32 0.0, %v908
    %v910 = vpop.f32.mrb[0].mxu0
    %911 = vmatprep.mubr.f32.mxu0 0.0
    %912 = vmatmul.mubr.f32.gmra.mrb[0].mxu0 %v111
    %v913 = vpop.f32.mrb[0].mxu0
    %v914 = vadd.f32 0.0, %v913
    %v915 = vpop.f32.mrb[0].mxu0
    %916 = vdwg.mxu0
    %s917 = scalar_lea.vmem [#allocation8], 256
    %v918 = vld [vmem:[%s917] sm:$0xff]
    %v919 = vld [vmem:[%s917 + $0x8] sm:$0xff]
    %v920 = vld [vmem:[%s917 + $0x10] sm:$0xff]
    %v921 = vld [vmem:[%s917 + $0x18] sm:$0xff]
    %v922 = vld [vmem:[%s917 + $0x20] sm:$0xff]
    %v923 = vld [vmem:[%s917 + $0x28] sm:$0xff]
    %v924 = vld [vmem:[%s917 + $0x30] sm:$0xff]
    %v925 = vld [vmem:[%s917 + $0x38] sm:$0xff]
    %v926 = vld [vmem:[%s917 + $0x40] sm:$0xff]
    %v927 = vld [vmem:[%s917 + $0x48] sm:$0xff]
    %v928 = vld [vmem:[%s917 + $0x50] sm:$0xff]
    %v929 = vld [vmem:[%s917 + $0x58] sm:$0xff]
    %v930 = vld [vmem:[%s917 + $0x60] sm:$0xff]
    %v931 = vld [vmem:[%s917 + $0x68] sm:$0xff]
    %v932 = vld [vmem:[%s917 + $0x70] sm:$0xff]
    %v933 = vld [vmem:[%s917 + $0x78] sm:$0xff]
    %s934 = scalar_lea.vmem %s4, 2
    %v935 = vld [vmem:[%s934] sm:$0x1]
    %v937 = vlaneseq
    %v938 = vshrl.u32 %v937, 7
    %v939 = vsub.s32 0, %v938
    %v940 = vrot.slane %v935, %v939
    %942 = vmatprep.subr.mxu0 0.0
    %943 = vmatpush1.msra.mxu0 %v918
    %944 = vmatprep.subr.mxu0 0.0
    %945 = vmatpush1.msra.mxu0 %v919
    %946 = vmatprep.subr.mxu0 0.0
    %947 = vmatpush1.msra.mxu0 %v920
    %948 = vmatprep.subr.mxu0 0.0
    %949 = vmatpush1.msra.mxu0 %v921
    %950 = vmatprep.subr.mxu0 0.0
    %951 = vmatpush1.msra.mxu0 %v922
    %952 = vmatprep.subr.mxu0 0.0
    %953 = vmatpush1.msra.mxu0 %v923
    %954 = vmatprep.subr.mxu0 0.0
    %955 = vmatpush1.msra.mxu0 %v924
    %956 = vmatprep.subr.mxu0 0.0
    %957 = vmatpush1.msra.mxu0 %v925
    %958 = vmatprep.subr.mxu0 0.0
    %959 = vmatpush1.msra.mxu0 %v926
    %960 = vmatprep.subr.mxu0 0.0
    %961 = vmatpush1.msra.mxu0 %v927
    %962 = vmatprep.subr.mxu0 0.0
    %963 = vmatpush1.msra.mxu0 %v928
    %964 = vmatprep.subr.mxu0 0.0
    %965 = vmatpush1.msra.mxu0 %v929
    %966 = vmatprep.subr.mxu0 0.0
    %967 = vmatpush1.msra.mxu0 %v930
    %968 = vmatprep.subr.mxu0 0.0
    %969 = vmatpush1.msra.mxu0 %v931
    %970 = vmatprep.subr.mxu0 0.0
    %971 = vmatpush1.msra.mxu0 %v932
    %972 = vmatprep.subr.mxu0 0.0
    %973 = vmatpush1.msra.mxu0 %v933
    %974 = vmatprep.subr.mxu0 0.0
    %975 = vmatpush1.msra.mxu0 0.0
    %976 = vmatprep.subr.mxu0 0.0
    %977 = vmatpush1.msra.mxu0 0.0
    %978 = vmatprep.subr.mxu0 0.0
    %979 = vmatpush1.msra.mxu0 0.0
    %980 = vmatprep.subr.mxu0 0.0
    %981 = vmatpush1.msra.mxu0 0.0
    %982 = vmatprep.subr.mxu0 0.0
    %983 = vmatpush1.msra.mxu0 0.0
    %984 = vmatprep.subr.mxu0 0.0
    %985 = vmatpush1.msra.mxu0 0.0
    %986 = vmatprep.subr.mxu0 0.0
    %987 = vmatpush1.msra.mxu0 0.0
    %988 = vmatprep.subr.mxu0 0.0
    %989 = vmatpush1.msra.mxu0 0.0
    %990 = vmatprep.subr.mxu0 0.0
    %991 = vmatpush1.msra.mxu0 0.0
    %992 = vmatprep.subr.mxu0 0.0
    %993 = vmatpush1.msra.mxu0 0.0
    %994 = vmatprep.subr.mxu0 0.0
    %995 = vmatpush1.msra.mxu0 0.0
    %996 = vmatprep.subr.mxu0 0.0
    %997 = vmatpush1.msra.mxu0 0.0
    %998 = vmatprep.subr.mxu0 0.0
    %999 = vmatpush1.msra.mxu0 0.0
    %1000 = vmatprep.subr.mxu0 0.0
    %1001 = vmatpush1.msra.mxu0 0.0
    %1002 = vmatprep.subr.mxu0 0.0
    %1003 = vmatpush1.msra.mxu0 0.0
    %1004 = vmatprep.subr.mxu0 0.0
    %1005 = vmatpush1.msra.mxu0 0.0
    %1006 = vmatprep.mubr.f32.mxu0 0.0
    %1007 = vmatmul.mubr.f32.gmra.mrb[0].mxu0 %v839
    %v1008 = vpop.f32.mrb[0].mxu0
    %v1009 = vadd.f32 %v940, %v1008
    %v1010 = vpop.f32.mrb[0].mxu0
    %1011 = vmatprep.mubr.f32.mxu0 0.0
    %1012 = vmatmul.mubr.f32.gmra.mrb[0].mxu0 %v844
    %v1013 = vpop.f32.mrb[0].mxu0
    %v1014 = vadd.f32 %v940, %v1013
    %v1015 = vpop.f32.mrb[0].mxu0
    %1016 = vmatprep.mubr.f32.mxu0 0.0
    %1017 = vmatmul.mubr.f32.gmra.mrb[0].mxu0 %v849
    %v1018 = vpop.f32.mrb[0].mxu0
    %v1019 = vadd.f32 %v940, %v1018
    %v1020 = vpop.f32.mrb[0].mxu0
    %1021 = vmatprep.mubr.f32.mxu0 0.0
    %1022 = vmatmul.mubr.f32.gmra.mrb[0].mxu0 %v854
    %v1023 = vpop.f32.mrb[0].mxu0
    %v1024 = vadd.f32 %v940, %v1023
    %v1025 = vpop.f32.mrb[0].mxu0
    %1026 = vmatprep.mubr.f32.mxu0 0.0
    %1027 = vmatmul.mubr.f32.gmra.mrb[0].mxu0 %v859
    %v1028 = vpop.f32.mrb[0].mxu0
    %v1029 = vadd.f32 %v940, %v1028
    %v1030 = vpop.f32.mrb[0].mxu0
    %1031 = vmatprep.mubr.f32.mxu0 0.0
    %1032 = vmatmul.mubr.f32.gmra.mrb[0].mxu0 %v864
    %v1033 = vpop.f32.mrb[0].mxu0
    %v1034 = vadd.f32 %v940, %v1033
    %v1035 = vpop.f32.mrb[0].mxu0
    %1036 = vmatprep.mubr.f32.mxu0 0.0
    %1037 = vmatmul.mubr.f32.gmra.mrb[0].mxu0 %v869
    %v1038 = vpop.f32.mrb[0].mxu0
    %v1039 = vadd.f32 %v940, %v1038
    %v1040 = vpop.f32.mrb[0].mxu0
    %1041 = vmatprep.mubr.f32.mxu0 0.0
    %1042 = vmatmul.mubr.f32.gmra.mrb[0].mxu0 %v874
    %v1043 = vpop.f32.mrb[0].mxu0
    %v1044 = vadd.f32 %v940, %v1043
    %v1045 = vpop.f32.mrb[0].mxu0
    %1046 = vmatprep.mubr.f32.mxu0 0.0
    %1047 = vmatmul.mubr.f32.gmra.mrb[0].mxu0 %v879
    %v1048 = vpop.f32.mrb[0].mxu0
    %v1049 = vadd.f32 %v940, %v1048
    %v1050 = vpop.f32.mrb[0].mxu0
    %1051 = vmatprep.mubr.f32.mxu0 0.0
    %1052 = vmatmul.mubr.f32.gmra.mrb[0].mxu0 %v884
    %v1053 = vpop.f32.mrb[0].mxu0
    %v1054 = vadd.f32 %v940, %v1053
    %v1055 = vpop.f32.mrb[0].mxu0
    %1056 = vmatprep.mubr.f32.mxu0 0.0
    %1057 = vmatmul.mubr.f32.gmra.mrb[0].mxu0 %v889
    %v1058 = vpop.f32.mrb[0].mxu0
    %v1059 = vadd.f32 %v940, %v1058
    %v1060 = vpop.f32.mrb[0].mxu0
    %1061 = vmatprep.mubr.f32.mxu0 0.0
    %1062 = vmatmul.mubr.f32.gmra.mrb[0].mxu0 %v894
    %v1063 = vpop.f32.mrb[0].mxu0
    %v1064 = vadd.f32 %v940, %v1063
    %v1065 = vpop.f32.mrb[0].mxu0
    %1066 = vmatprep.mubr.f32.mxu0 0.0
    %1067 = vmatmul.mubr.f32.gmra.mrb[0].mxu0 %v899
    %v1068 = vpop.f32.mrb[0].mxu0
    %v1069 = vadd.f32 %v940, %v1068
    %v1070 = vpop.f32.mrb[0].mxu0
    %1071 = vmatprep.mubr.f32.mxu0 0.0
    %1072 = vmatmul.mubr.f32.gmra.mrb[0].mxu0 %v904
    %v1073 = vpop.f32.mrb[0].mxu0
    %v1074 = vadd.f32 %v940, %v1073
    %v1075 = vpop.f32.mrb[0].mxu0
    %1076 = vmatprep.mubr.f32.mxu0 0.0
    %1077 = vmatmul.mubr.f32.gmra.mrb[0].mxu0 %v909
    %v1078 = vpop.f32.mrb[0].mxu0
    %v1079 = vadd.f32 %v940, %v1078
    %v1080 = vpop.f32.mrb[0].mxu0
    %1081 = vmatprep.mubr.f32.mxu0 0.0
    %1082 = vmatmul.mubr.f32.gmra.mrb[0].mxu0 %v914
    %v1083 = vpop.f32.mrb[0].mxu0
    %v1084 = vadd.f32 %v940, %v1083
    %v1085 = vpop.f32.mrb[0].mxu0
    %1086 = vdwg.mxu0
    %v1087 = vmax.f32 %v1009, 0.0
    %v1088 = vmax.f32 %v1014, 0.0
    %v1089 = vmax.f32 %v1019, 0.0
    %v1090 = vmax.f32 %v1024, 0.0
    %v1091 = vmax.f32 %v1029, 0.0
    %v1092 = vmax.f32 %v1034, 0.0
    %v1093 = vmax.f32 %v1039, 0.0
    %v1094 = vmax.f32 %v1044, 0.0
    %v1095 = vmax.f32 %v1049, 0.0
    %v1096 = vmax.f32 %v1054, 0.0
    %v1097 = vmax.f32 %v1059, 0.0
    %v1098 = vmax.f32 %v1064, 0.0
    %v1099 = vmax.f32 %v1069, 0.0
    %v1100 = vmax.f32 %v1074, 0.0
    %v1101 = vmax.f32 %v1079, 0.0
    %v1102 = vmax.f32 %v1084, 0.0
    %1103 = vmatprep.subr.mxu0 0.0
    %1104 = vmatpush1.msra.mxu0 %v1087
    %1105 = vmatprep.subr.mxu0 0.0
    %1106 = vmatpush1.msra.mxu0 %v1088
    %1107 = vmatprep.subr.mxu0 0.0
    %1108 = vmatpush1.msra.mxu0 %v1089
    %1109 = vmatprep.subr.mxu0 0.0
    %1110 = vmatpush1.msra.mxu0 %v1090
    %1111 = vmatprep.subr.mxu0 0.0
    %1112 = vmatpush1.msra.mxu0 %v1091
    %1113 = vmatprep.subr.mxu0 0.0
    %1114 = vmatpush1.msra.mxu0 %v1092
    %1115 = vmatprep.subr.mxu0 0.0
    %1116 = vmatpush1.msra.mxu0 %v1093
    %1117 = vmatprep.subr.mxu0 0.0
    %1118 = vmatpush1.msra.mxu0 %v1094
    %1119 = vmatprep.subr.mxu0 0.0
    %1120 = vmatpush1.msra.mxu0 %v1095
    %1121 = vmatprep.subr.mxu0 0.0
    %1122 = vmatpush1.msra.mxu0 %v1096
    %1123 = vmatprep.subr.mxu0 0.0
    %1124 = vmatpush1.msra.mxu0 %v1097
    %1125 = vmatprep.subr.mxu0 0.0
    %1126 = vmatpush1.msra.mxu0 %v1098
    %1127 = vmatprep.subr.mxu0 0.0
    %1128 = vmatpush1.msra.mxu0 %v1099
    %1129 = vmatprep.subr.mxu0 0.0
    %1130 = vmatpush1.msra.mxu0 %v1100
    %1131 = vmatprep.subr.mxu0 0.0
    %1132 = vmatpush1.msra.mxu0 %v1101
    %1133 = vmatprep.subr.mxu0 0.0
    %1134 = vmatpush1.msra.mxu0 %v1102
    %1135 = vmatprep.subr.mxu0 0.0
    %1136 = vmatpush1.msra.mxu0 0.0
    %1137 = vmatprep.subr.mxu0 0.0
    %1138 = vmatpush1.msra.mxu0 0.0
    %1139 = vmatprep.subr.mxu0 0.0
    %1140 = vmatpush1.msra.mxu0 0.0
    %1141 = vmatprep.subr.mxu0 0.0
    %1142 = vmatpush1.msra.mxu0 0.0
    %1143 = vmatprep.subr.mxu0 0.0
    %1144 = vmatpush1.msra.mxu0 0.0
    %1145 = vmatprep.subr.mxu0 0.0
    %1146 = vmatpush1.msra.mxu0 0.0
    %1147 = vmatprep.subr.mxu0 0.0
    %1148 = vmatpush1.msra.mxu0 0.0
    %1149 = vmatprep.subr.mxu0 0.0
    %1150 = vmatpush1.msra.mxu0 0.0
    %1151 = vmatprep.subr.mxu0 0.0
    %1152 = vmatpush1.msra.mxu0 0.0
    %1153 = vmatprep.subr.mxu0 0.0
    %1154 = vmatpush1.msra.mxu0 0.0
    %1155 = vmatprep.subr.mxu0 0.0
    %1156 = vmatpush1.msra.mxu0 0.0
    %1157 = vmatprep.subr.mxu0 0.0
    %1158 = vmatpush1.msra.mxu0 0.0
    %1159 = vmatprep.subr.mxu0 0.0
    %1160 = vmatpush1.msra.mxu0 0.0
    %1161 = vmatprep.subr.mxu0 0.0
    %1162 = vmatpush1.msra.mxu0 0.0
    %1163 = vmatprep.subr.mxu0 0.0
    %1164 = vmatpush1.msra.mxu0 0.0
    %1165 = vmatprep.subr.mxu0 0.0
    %1166 = vmatpush1.msra.mxu0 0.0
    %1167 = vmatprep.mubr.f32.mxu0 0.0
    %1168 = vmatmul.mubr.f32.gmra.mrb[0].mxu0 %v96
    %v1169 = vpop.f32.mrb[0].mxu0
    %v1170 = vadd.f32 0.0, %v1169
    %v1171 = vpop.f32.mrb[0].mxu0
    %1172 = vmatprep.mubr.f32.mxu0 0.0
    %1173 = vmatmul.mubr.f32.gmra.mrb[0].mxu0 %v97
    %v1174 = vpop.f32.mrb[0].mxu0
    %v1175 = vadd.f32 0.0, %v1174
    %v1176 = vpop.f32.mrb[0].mxu0
    %1177 = vmatprep.mubr.f32.mxu0 0.0
    %1178 = vmatmul.mubr.f32.gmra.mrb[0].mxu0 %v98
    %v1179 = vpop.f32.mrb[0].mxu0
    %v1180 = vadd.f32 0.0, %v1179
    %v1181 = vpop.f32.mrb[0].mxu0
    %1182 = vmatprep.mubr.f32.mxu0 0.0
    %1183 = vmatmul.mubr.f32.gmra.mrb[0].mxu0 %v99
    %v1184 = vpop.f32.mrb[0].mxu0
    %v1185 = vadd.f32 0.0, %v1184
    %v1186 = vpop.f32.mrb[0].mxu0
    %1187 = vmatprep.mubr.f32.mxu0 0.0
    %1188 = vmatmul.mubr.f32.gmra.mrb[0].mxu0 %v100
    %v1189 = vpop.f32.mrb[0].mxu0
    %v1190 = vadd.f32 0.0, %v1189
    %v1191 = vpop.f32.mrb[0].mxu0
    %1192 = vmatprep.mubr.f32.mxu0 0.0
    %1193 = vmatmul.mubr.f32.gmra.mrb[0].mxu0 %v101
    %v1194 = vpop.f32.mrb[0].mxu0
    %v1195 = vadd.f32 0.0, %v1194
    %v1196 = vpop.f32.mrb[0].mxu0
    %1197 = vmatprep.mubr.f32.mxu0 0.0
    %1198 = vmatmul.mubr.f32.gmra.mrb[0].mxu0 %v102
    %v1199 = vpop.f32.mrb[0].mxu0
    %v1200 = vadd.f32 0.0, %v1199
    %v1201 = vpop.f32.mrb[0].mxu0
    %1202 = vmatprep.mubr.f32.mxu0 0.0
    %1203 = vmatmul.mubr.f32.gmra.mrb[0].mxu0 %v103
    %v1204 = vpop.f32.mrb[0].mxu0
    %v1205 = vadd.f32 0.0, %v1204
    %v1206 = vpop.f32.mrb[0].mxu0
    %1207 = vmatprep.mubr.f32.mxu0 0.0
    %1208 = vmatmul.mubr.f32.gmra.mrb[0].mxu0 %v104
    %v1209 = vpop.f32.mrb[0].mxu0
    %v1210 = vadd.f32 0.0, %v1209
    %v1211 = vpop.f32.mrb[0].mxu0
    %1212 = vmatprep.mubr.f32.mxu0 0.0
    %1213 = vmatmul.mubr.f32.gmra.mrb[0].mxu0 %v105
    %v1214 = vpop.f32.mrb[0].mxu0
    %v1215 = vadd.f32 0.0, %v1214
    %v1216 = vpop.f32.mrb[0].mxu0
    %1217 = vmatprep.mubr.f32.mxu0 0.0
    %1218 = vmatmul.mubr.f32.gmra.mrb[0].mxu0 %v106
    %v1219 = vpop.f32.mrb[0].mxu0
    %v1220 = vadd.f32 0.0, %v1219
    %v1221 = vpop.f32.mrb[0].mxu0
    %1222 = vmatprep.mubr.f32.mxu0 0.0
    %1223 = vmatmul.mubr.f32.gmra.mrb[0].mxu0 %v107
    %v1224 = vpop.f32.mrb[0].mxu0
    %v1225 = vadd.f32 0.0, %v1224
    %v1226 = vpop.f32.mrb[0].mxu0
    %1227 = vmatprep.mubr.f32.mxu0 0.0
    %1228 = vmatmul.mubr.f32.gmra.mrb[0].mxu0 %v108
    %v1229 = vpop.f32.mrb[0].mxu0
    %v1230 = vadd.f32 0.0, %v1229
    %v1231 = vpop.f32.mrb[0].mxu0
    %1232 = vmatprep.mubr.f32.mxu0 0.0
    %1233 = vmatmul.mubr.f32.gmra.mrb[0].mxu0 %v109
    %v1234 = vpop.f32.mrb[0].mxu0
    %v1235 = vadd.f32 0.0, %v1234
    %v1236 = vpop.f32.mrb[0].mxu0
    %1237 = vmatprep.mubr.f32.mxu0 0.0
    %1238 = vmatmul.mubr.f32.gmra.mrb[0].mxu0 %v110
    %v1239 = vpop.f32.mrb[0].mxu0
    %v1240 = vadd.f32 0.0, %v1239
    %v1241 = vpop.f32.mrb[0].mxu0
    %1242 = vmatprep.mubr.f32.mxu0 0.0
    %1243 = vmatmul.mubr.f32.gmra.mrb[0].mxu0 %v111
    %v1244 = vpop.f32.mrb[0].mxu0
    %v1245 = vadd.f32 0.0, %v1244
    %v1246 = vpop.f32.mrb[0].mxu0
    %1247 = vdwg.mxu0
    %s1248 = scalar_lea.vmem [#allocation8], 384
    %v1249 = vld [vmem:[%s1248] sm:$0xff]
    %v1250 = vld [vmem:[%s1248 + $0x8] sm:$0xff]
    %v1251 = vld [vmem:[%s1248 + $0x10] sm:$0xff]
    %v1252 = vld [vmem:[%s1248 + $0x18] sm:$0xff]
    %v1253 = vld [vmem:[%s1248 + $0x20] sm:$0xff]
    %v1254 = vld [vmem:[%s1248 + $0x28] sm:$0xff]
    %v1255 = vld [vmem:[%s1248 + $0x30] sm:$0xff]
    %v1256 = vld [vmem:[%s1248 + $0x38] sm:$0xff]
    %v1257 = vld [vmem:[%s1248 + $0x40] sm:$0xff]
    %v1258 = vld [vmem:[%s1248 + $0x48] sm:$0xff]
    %v1259 = vld [vmem:[%s1248 + $0x50] sm:$0xff]
    %v1260 = vld [vmem:[%s1248 + $0x58] sm:$0xff]
    %v1261 = vld [vmem:[%s1248 + $0x60] sm:$0xff]
    %v1262 = vld [vmem:[%s1248 + $0x68] sm:$0xff]
    %v1263 = vld [vmem:[%s1248 + $0x70] sm:$0xff]
    %v1264 = vld [vmem:[%s1248 + $0x78] sm:$0xff]
    %s1265 = scalar_lea.vmem %s4, 3
    %v1266 = vld [vmem:[%s1265] sm:$0x1]
    %v1268 = vlaneseq
    %v1269 = vshrl.u32 %v1268, 7
    %v1270 = vsub.s32 0, %v1269
    %v1271 = vrot.slane %v1266, %v1270
    %1273 = vmatprep.subr.mxu0 0.0
    %1274 = vmatpush1.msra.mxu0 %v1249
    %1275 = vmatprep.subr.mxu0 0.0
    %1276 = vmatpush1.msra.mxu0 %v1250
    %1277 = vmatprep.subr.mxu0 0.0
    %1278 = vmatpush1.msra.mxu0 %v1251
    %1279 = vmatprep.subr.mxu0 0.0
    %1280 = vmatpush1.msra.mxu0 %v1252
    %1281 = vmatprep.subr.mxu0 0.0
    %1282 = vmatpush1.msra.mxu0 %v1253
    %1283 = vmatprep.subr.mxu0 0.0
    %1284 = vmatpush1.msra.mxu0 %v1254
    %1285 = vmatprep.subr.mxu0 0.0
    %1286 = vmatpush1.msra.mxu0 %v1255
    %1287 = vmatprep.subr.mxu0 0.0
    %1288 = vmatpush1.msra.mxu0 %v1256
    %1289 = vmatprep.subr.mxu0 0.0
    %1290 = vmatpush1.msra.mxu0 %v1257
    %1291 = vmatprep.subr.mxu0 0.0
    %1292 = vmatpush1.msra.mxu0 %v1258
    %1293 = vmatprep.subr.mxu0 0.0
    %1294 = vmatpush1.msra.mxu0 %v1259
    %1295 = vmatprep.subr.mxu0 0.0
    %1296 = vmatpush1.msra.mxu0 %v1260
    %1297 = vmatprep.subr.mxu0 0.0
    %1298 = vmatpush1.msra.mxu0 %v1261
    %1299 = vmatprep.subr.mxu0 0.0
    %1300 = vmatpush1.msra.mxu0 %v1262
    %1301 = vmatprep.subr.mxu0 0.0
    %1302 = vmatpush1.msra.mxu0 %v1263
    %1303 = vmatprep.subr.mxu0 0.0
    %1304 = vmatpush1.msra.mxu0 %v1264
    %1305 = vmatprep.subr.mxu0 0.0
    %1306 = vmatpush1.msra.mxu0 0.0
    %1307 = vmatprep.subr.mxu0 0.0
    %1308 = vmatpush1.msra.mxu0 0.0
    %1309 = vmatprep.subr.mxu0 0.0
    %1310 = vmatpush1.msra.mxu0 0.0
    %1311 = vmatprep.subr.mxu0 0.0
    %1312 = vmatpush1.msra.mxu0 0.0
    %1313 = vmatprep.subr.mxu0 0.0
    %1314 = vmatpush1.msra.mxu0 0.0
    %1315 = vmatprep.subr.mxu0 0.0
    %1316 = vmatpush1.msra.mxu0 0.0
    %1317 = vmatprep.subr.mxu0 0.0
    %1318 = vmatpush1.msra.mxu0 0.0
    %1319 = vmatprep.subr.mxu0 0.0
    %1320 = vmatpush1.msra.mxu0 0.0
    %1321 = vmatprep.subr.mxu0 0.0
    %1322 = vmatpush1.msra.mxu0 0.0
    %1323 = vmatprep.subr.mxu0 0.0
    %1324 = vmatpush1.msra.mxu0 0.0
    %1325 = vmatprep.subr.mxu0 0.0
    %1326 = vmatpush1.msra.mxu0 0.0
    %1327 = vmatprep.subr.mxu0 0.0
    %1328 = vmatpush1.msra.mxu0 0.0
    %1329 = vmatprep.subr.mxu0 0.0
    %1330 = vmatpush1.msra.mxu0 0.0
    %1331 = vmatprep.subr.mxu0 0.0
    %1332 = vmatpush1.msra.mxu0 0.0
    %1333 = vmatprep.subr.mxu0 0.0
    %1334 = vmatpush1.msra.mxu0 0.0
    %1335 = vmatprep.subr.mxu0 0.0
    %1336 = vmatpush1.msra.mxu0 0.0
    %1337 = vmatprep.mubr.f32.mxu0 0.0
    %1338 = vmatmul.mubr.f32.gmra.mrb[0].mxu0 %v1170
    %v1339 = vpop.f32.mrb[0].mxu0
    %v1340 = vadd.f32 %v1271, %v1339
    %v1341 = vpop.f32.mrb[0].mxu0
    %1342 = vmatprep.mubr.f32.mxu0 0.0
    %1343 = vmatmul.mubr.f32.gmra.mrb[0].mxu0 %v1175
    %v1344 = vpop.f32.mrb[0].mxu0
    %v1345 = vadd.f32 %v1271, %v1344
    %v1346 = vpop.f32.mrb[0].mxu0
    %1347 = vmatprep.mubr.f32.mxu0 0.0
    %1348 = vmatmul.mubr.f32.gmra.mrb[0].mxu0 %v1180
    %v1349 = vpop.f32.mrb[0].mxu0
    %v1350 = vadd.f32 %v1271, %v1349
    %v1351 = vpop.f32.mrb[0].mxu0
    %1352 = vmatprep.mubr.f32.mxu0 0.0
    %1353 = vmatmul.mubr.f32.gmra.mrb[0].mxu0 %v1185
    %v1354 = vpop.f32.mrb[0].mxu0
    %v1355 = vadd.f32 %v1271, %v1354
    %v1356 = vpop.f32.mrb[0].mxu0
    %1357 = vmatprep.mubr.f32.mxu0 0.0
    %1358 = vmatmul.mubr.f32.gmra.mrb[0].mxu0 %v1190
    %v1359 = vpop.f32.mrb[0].mxu0
    %v1360 = vadd.f32 %v1271, %v1359
    %v1361 = vpop.f32.mrb[0].mxu0
    %1362 = vmatprep.mubr.f32.mxu0 0.0
    %1363 = vmatmul.mubr.f32.gmra.mrb[0].mxu0 %v1195
    %v1364 = vpop.f32.mrb[0].mxu0
    %v1365 = vadd.f32 %v1271, %v1364
    %v1366 = vpop.f32.mrb[0].mxu0
    %1367 = vmatprep.mubr.f32.mxu0 0.0
    %1368 = vmatmul.mubr.f32.gmra.mrb[0].mxu0 %v1200
    %v1369 = vpop.f32.mrb[0].mxu0
    %v1370 = vadd.f32 %v1271, %v1369
    %v1371 = vpop.f32.mrb[0].mxu0
    %1372 = vmatprep.mubr.f32.mxu0 0.0
    %1373 = vmatmul.mubr.f32.gmra.mrb[0].mxu0 %v1205
    %v1374 = vpop.f32.mrb[0].mxu0
    %v1375 = vadd.f32 %v1271, %v1374
    %v1376 = vpop.f32.mrb[0].mxu0
    %1377 = vmatprep.mubr.f32.mxu0 0.0
    %1378 = vmatmul.mubr.f32.gmra.mrb[0].mxu0 %v1210
    %v1379 = vpop.f32.mrb[0].mxu0
    %v1380 = vadd.f32 %v1271, %v1379
    %v1381 = vpop.f32.mrb[0].mxu0
    %1382 = vmatprep.mubr.f32.mxu0 0.0
    %1383 = vmatmul.mubr.f32.gmra.mrb[0].mxu0 %v1215
    %v1384 = vpop.f32.mrb[0].mxu0
    %v1385 = vadd.f32 %v1271, %v1384
    %v1386 = vpop.f32.mrb[0].mxu0
    %1387 = vmatprep.mubr.f32.mxu0 0.0
    %1388 = vmatmul.mubr.f32.gmra.mrb[0].mxu0 %v1220
    %v1389 = vpop.f32.mrb[0].mxu0
    %v1390 = vadd.f32 %v1271, %v1389
    %v1391 = vpop.f32.mrb[0].mxu0
    %1392 = vmatprep.mubr.f32.mxu0 0.0
    %1393 = vmatmul.mubr.f32.gmra.mrb[0].mxu0 %v1225
    %v1394 = vpop.f32.mrb[0].mxu0
    %v1395 = vadd.f32 %v1271, %v1394
    %v1396 = vpop.f32.mrb[0].mxu0
    %1397 = vmatprep.mubr.f32.mxu0 0.0
    %1398 = vmatmul.mubr.f32.gmra.mrb[0].mxu0 %v1230
    %v1399 = vpop.f32.mrb[0].mxu0
    %v1400 = vadd.f32 %v1271, %v1399
    %v1401 = vpop.f32.mrb[0].mxu0
    %1402 = vmatprep.mubr.f32.mxu0 0.0
    %1403 = vmatmul.mubr.f32.gmra.mrb[0].mxu0 %v1235
    %v1404 = vpop.f32.mrb[0].mxu0
    %v1405 = vadd.f32 %v1271, %v1404
    %v1406 = vpop.f32.mrb[0].mxu0
    %1407 = vmatprep.mubr.f32.mxu0 0.0
    %1408 = vmatmul.mubr.f32.gmra.mrb[0].mxu0 %v1240
    %v1409 = vpop.f32.mrb[0].mxu0
    %v1410 = vadd.f32 %v1271, %v1409
    %v1411 = vpop.f32.mrb[0].mxu0
    %1412 = vmatprep.mubr.f32.mxu0 0.0
    %1413 = vmatmul.mubr.f32.gmra.mrb[0].mxu0 %v1245
    %v1414 = vpop.f32.mrb[0].mxu0
    %v1415 = vadd.f32 %v1271, %v1414
    %v1416 = vpop.f32.mrb[0].mxu0
    %1417 = vdwg.mxu0
    %v1418 = vmax.f32 %v1340, 0.0
    %v1419 = vmax.f32 %v1345, 0.0
    %v1420 = vmax.f32 %v1350, 0.0
    %v1421 = vmax.f32 %v1355, 0.0
    %v1422 = vmax.f32 %v1360, 0.0
    %v1423 = vmax.f32 %v1365, 0.0
    %v1424 = vmax.f32 %v1370, 0.0
    %v1425 = vmax.f32 %v1375, 0.0
    %v1426 = vmax.f32 %v1380, 0.0
    %v1427 = vmax.f32 %v1385, 0.0
    %v1428 = vmax.f32 %v1390, 0.0
    %v1429 = vmax.f32 %v1395, 0.0
    %v1430 = vmax.f32 %v1400, 0.0
    %v1431 = vmax.f32 %v1405, 0.0
    %v1432 = vmax.f32 %v1410, 0.0
    %v1433 = vmax.f32 %v1415, 0.0
    %1434 = vmatprep.subr.mxu0 0.0
    %1435 = vmatpush1.msra.mxu0 %v1418
    %1436 = vmatprep.subr.mxu0 0.0
    %1437 = vmatpush1.msra.mxu0 %v1419
    %1438 = vmatprep.subr.mxu0 0.0
    %1439 = vmatpush1.msra.mxu0 %v1420
    %1440 = vmatprep.subr.mxu0 0.0
    %1441 = vmatpush1.msra.mxu0 %v1421
    %1442 = vmatprep.subr.mxu0 0.0
    %1443 = vmatpush1.msra.mxu0 %v1422
    %1444 = vmatprep.subr.mxu0 0.0
    %1445 = vmatpush1.msra.mxu0 %v1423
    %1446 = vmatprep.subr.mxu0 0.0
    %1447 = vmatpush1.msra.mxu0 %v1424
    %1448 = vmatprep.subr.mxu0 0.0
    %1449 = vmatpush1.msra.mxu0 %v1425
    %1450 = vmatprep.subr.mxu0 0.0
    %1451 = vmatpush1.msra.mxu0 %v1426
    %1452 = vmatprep.subr.mxu0 0.0
    %1453 = vmatpush1.msra.mxu0 %v1427
    %1454 = vmatprep.subr.mxu0 0.0
    %1455 = vmatpush1.msra.mxu0 %v1428
    %1456 = vmatprep.subr.mxu0 0.0
    %1457 = vmatpush1.msra.mxu0 %v1429
    %1458 = vmatprep.subr.mxu0 0.0
    %1459 = vmatpush1.msra.mxu0 %v1430
    %1460 = vmatprep.subr.mxu0 0.0
    %1461 = vmatpush1.msra.mxu0 %v1431
    %1462 = vmatprep.subr.mxu0 0.0
    %1463 = vmatpush1.msra.mxu0 %v1432
    %1464 = vmatprep.subr.mxu0 0.0
    %1465 = vmatpush1.msra.mxu0 %v1433
    %1466 = vmatprep.subr.mxu0 0.0
    %1467 = vmatpush1.msra.mxu0 0.0
    %1468 = vmatprep.subr.mxu0 0.0
    %1469 = vmatpush1.msra.mxu0 0.0
    %1470 = vmatprep.subr.mxu0 0.0
    %1471 = vmatpush1.msra.mxu0 0.0
    %1472 = vmatprep.subr.mxu0 0.0
    %1473 = vmatpush1.msra.mxu0 0.0
    %1474 = vmatprep.subr.mxu0 0.0
    %1475 = vmatpush1.msra.mxu0 0.0
    %1476 = vmatprep.subr.mxu0 0.0
    %1477 = vmatpush1.msra.mxu0 0.0
    %1478 = vmatprep.subr.mxu0 0.0
    %1479 = vmatpush1.msra.mxu0 0.0
    %1480 = vmatprep.subr.mxu0 0.0
    %1481 = vmatpush1.msra.mxu0 0.0
    %1482 = vmatprep.subr.mxu0 0.0
    %1483 = vmatpush1.msra.mxu0 0.0
    %1484 = vmatprep.subr.mxu0 0.0
    %1485 = vmatpush1.msra.mxu0 0.0
    %1486 = vmatprep.subr.mxu0 0.0
    %1487 = vmatpush1.msra.mxu0 0.0
    %1488 = vmatprep.subr.mxu0 0.0
    %1489 = vmatpush1.msra.mxu0 0.0
    %1490 = vmatprep.subr.mxu0 0.0
    %1491 = vmatpush1.msra.mxu0 0.0
    %1492 = vmatprep.subr.mxu0 0.0
    %1493 = vmatpush1.msra.mxu0 0.0
    %1494 = vmatprep.subr.mxu0 0.0
    %1495 = vmatpush1.msra.mxu0 0.0
    %1496 = vmatprep.subr.mxu0 0.0
    %1497 = vmatpush1.msra.mxu0 0.0
    %1498 = vmatprep.mubr.f32.mxu0 0.0
    %1499 = vmatmul.mubr.f32.gmra.mrb[0].mxu0 %v96
    %v1500 = vpop.f32.mrb[0].mxu0
    %v1501 = vadd.f32 0.0, %v1500
    %v1502 = vpop.f32.mrb[0].mxu0
    %1503 = vmatprep.mubr.f32.mxu0 0.0
    %1504 = vmatmul.mubr.f32.gmra.mrb[0].mxu0 %v97
    %v1505 = vpop.f32.mrb[0].mxu0
    %v1506 = vadd.f32 0.0, %v1505
    %v1507 = vpop.f32.mrb[0].mxu0
    %1508 = vmatprep.mubr.f32.mxu0 0.0
    %1509 = vmatmul.mubr.f32.gmra.mrb[0].mxu0 %v98
    %v1510 = vpop.f32.mrb[0].mxu0
    %v1511 = vadd.f32 0.0, %v1510
    %v1512 = vpop.f32.mrb[0].mxu0
    %1513 = vmatprep.mubr.f32.mxu0 0.0
    %1514 = vmatmul.mubr.f32.gmra.mrb[0].mxu0 %v99
    %v1515 = vpop.f32.mrb[0].mxu0
    %v1516 = vadd.f32 0.0, %v1515
    %v1517 = vpop.f32.mrb[0].mxu0
    %1518 = vmatprep.mubr.f32.mxu0 0.0
    %1519 = vmatmul.mubr.f32.gmra.mrb[0].mxu0 %v100
    %v1520 = vpop.f32.mrb[0].mxu0
    %v1521 = vadd.f32 0.0, %v1520
    %v1522 = vpop.f32.mrb[0].mxu0
    %1523 = vmatprep.mubr.f32.mxu0 0.0
    %1524 = vmatmul.mubr.f32.gmra.mrb[0].mxu0 %v101
    %v1525 = vpop.f32.mrb[0].mxu0
    %v1526 = vadd.f32 0.0, %v1525
    %v1527 = vpop.f32.mrb[0].mxu0
    %1528 = vmatprep.mubr.f32.mxu0 0.0
    %1529 = vmatmul.mubr.f32.gmra.mrb[0].mxu0 %v102
    %v1530 = vpop.f32.mrb[0].mxu0
    %v1531 = vadd.f32 0.0, %v1530
    %v1532 = vpop.f32.mrb[0].mxu0
    %1533 = vmatprep.mubr.f32.mxu0 0.0
    %1534 = vmatmul.mubr.f32.gmra.mrb[0].mxu0 %v103
    %v1535 = vpop.f32.mrb[0].mxu0
    %v1536 = vadd.f32 0.0, %v1535
    %v1537 = vpop.f32.mrb[0].mxu0
    %1538 = vmatprep.mubr.f32.mxu0 0.0
    %1539 = vmatmul.mubr.f32.gmra.mrb[0].mxu0 %v104
    %v1540 = vpop.f32.mrb[0].mxu0
    %v1541 = vadd.f32 0.0, %v1540
    %v1542 = vpop.f32.mrb[0].mxu0
    %1543 = vmatprep.mubr.f32.mxu0 0.0
    %1544 = vmatmul.mubr.f32.gmra.mrb[0].mxu0 %v105
    %v1545 = vpop.f32.mrb[0].mxu0
    %v1546 = vadd.f32 0.0, %v1545
    %v1547 = vpop.f32.mrb[0].mxu0
    %1548 = vmatprep.mubr.f32.mxu0 0.0
    %1549 = vmatmul.mubr.f32.gmra.mrb[0].mxu0 %v106
    %v1550 = vpop.f32.mrb[0].mxu0
    %v1551 = vadd.f32 0.0, %v1550
    %v1552 = vpop.f32.mrb[0].mxu0
    %1553 = vmatprep.mubr.f32.mxu0 0.0
    %1554 = vmatmul.mubr.f32.gmra.mrb[0].mxu0 %v107
    %v1555 = vpop.f32.mrb[0].mxu0
    %v1556 = vadd.f32 0.0, %v1555
    %v1557 = vpop.f32.mrb[0].mxu0
    %1558 = vmatprep.mubr.f32.mxu0 0.0
    %1559 = vmatmul.mubr.f32.gmra.mrb[0].mxu0 %v108
    %v1560 = vpop.f32.mrb[0].mxu0
    %v1561 = vadd.f32 0.0, %v1560
    %v1562 = vpop.f32.mrb[0].mxu0
    %1563 = vmatprep.mubr.f32.mxu0 0.0
    %1564 = vmatmul.mubr.f32.gmra.mrb[0].mxu0 %v109
    %v1565 = vpop.f32.mrb[0].mxu0
    %v1566 = vadd.f32 0.0, %v1565
    %v1567 = vpop.f32.mrb[0].mxu0
    %1568 = vmatprep.mubr.f32.mxu0 0.0
    %1569 = vmatmul.mubr.f32.gmra.mrb[0].mxu0 %v110
    %v1570 = vpop.f32.mrb[0].mxu0
    %v1571 = vadd.f32 0.0, %v1570
    %v1572 = vpop.f32.mrb[0].mxu0
    %1573 = vmatprep.mubr.f32.mxu0 0.0
    %1574 = vmatmul.mubr.f32.gmra.mrb[0].mxu0 %v111
    %v1575 = vpop.f32.mrb[0].mxu0
    %v1576 = vadd.f32 0.0, %v1575
    %v1577 = vpop.f32.mrb[0].mxu0
    %1578 = vdwg.mxu0
    %s1579 = scalar_lea.vmem [#allocation8], 512
    %v1580 = vld [vmem:[%s1579] sm:$0xff]
    %v1581 = vld [vmem:[%s1579 + $0x8] sm:$0xff]
    %v1582 = vld [vmem:[%s1579 + $0x10] sm:$0xff]
    %v1583 = vld [vmem:[%s1579 + $0x18] sm:$0xff]
    %v1584 = vld [vmem:[%s1579 + $0x20] sm:$0xff]
    %v1585 = vld [vmem:[%s1579 + $0x28] sm:$0xff]
    %v1586 = vld [vmem:[%s1579 + $0x30] sm:$0xff]
    %v1587 = vld [vmem:[%s1579 + $0x38] sm:$0xff]
    %v1588 = vld [vmem:[%s1579 + $0x40] sm:$0xff]
    %v1589 = vld [vmem:[%s1579 + $0x48] sm:$0xff]
    %v1590 = vld [vmem:[%s1579 + $0x50] sm:$0xff]
    %v1591 = vld [vmem:[%s1579 + $0x58] sm:$0xff]
    %v1592 = vld [vmem:[%s1579 + $0x60] sm:$0xff]
    %v1593 = vld [vmem:[%s1579 + $0x68] sm:$0xff]
    %v1594 = vld [vmem:[%s1579 + $0x70] sm:$0xff]
    %v1595 = vld [vmem:[%s1579 + $0x78] sm:$0xff]
    %s1596 = scalar_lea.vmem %s4, 4
    %v1597 = vld [vmem:[%s1596] sm:$0x1]
    %v1599 = vlaneseq
    %v1600 = vshrl.u32 %v1599, 7
    %v1601 = vsub.s32 0, %v1600
    %v1602 = vrot.slane %v1597, %v1601
    %1604 = vmatprep.subr.mxu0 0.0
    %1605 = vmatpush1.msra.mxu0 %v1580
    %1606 = vmatprep.subr.mxu0 0.0
    %1607 = vmatpush1.msra.mxu0 %v1581
    %1608 = vmatprep.subr.mxu0 0.0
    %1609 = vmatpush1.msra.mxu0 %v1582
    %1610 = vmatprep.subr.mxu0 0.0
    %1611 = vmatpush1.msra.mxu0 %v1583
    %1612 = vmatprep.subr.mxu0 0.0
    %1613 = vmatpush1.msra.mxu0 %v1584
    %1614 = vmatprep.subr.mxu0 0.0
    %1615 = vmatpush1.msra.mxu0 %v1585
    %1616 = vmatprep.subr.mxu0 0.0
    %1617 = vmatpush1.msra.mxu0 %v1586
    %1618 = vmatprep.subr.mxu0 0.0
    %1619 = vmatpush1.msra.mxu0 %v1587
    %1620 = vmatprep.subr.mxu0 0.0
    %1621 = vmatpush1.msra.mxu0 %v1588
    %1622 = vmatprep.subr.mxu0 0.0
    %1623 = vmatpush1.msra.mxu0 %v1589
    %1624 = vmatprep.subr.mxu0 0.0
    %1625 = vmatpush1.msra.mxu0 %v1590
    %1626 = vmatprep.subr.mxu0 0.0
    %1627 = vmatpush1.msra.mxu0 %v1591
    %1628 = vmatprep.subr.mxu0 0.0
    %1629 = vmatpush1.msra.mxu0 %v1592
    %1630 = vmatprep.subr.mxu0 0.0
    %1631 = vmatpush1.msra.mxu0 %v1593
    %1632 = vmatprep.subr.mxu0 0.0
    %1633 = vmatpush1.msra.mxu0 %v1594
    %1634 = vmatprep.subr.mxu0 0.0
    %1635 = vmatpush1.msra.mxu0 %v1595
    %1636 = vmatprep.subr.mxu0 0.0
    %1637 = vmatpush1.msra.mxu0 0.0
    %1638 = vmatprep.subr.mxu0 0.0
    %1639 = vmatpush1.msra.mxu0 0.0
    %1640 = vmatprep.subr.mxu0 0.0
    %1641 = vmatpush1.msra.mxu0 0.0
    %1642 = vmatprep.subr.mxu0 0.0
    %1643 = vmatpush1.msra.mxu0 0.0
    %1644 = vmatprep.subr.mxu0 0.0
    %1645 = vmatpush1.msra.mxu0 0.0
    %1646 = vmatprep.subr.mxu0 0.0
    %1647 = vmatpush1.msra.mxu0 0.0
    %1648 = vmatprep.subr.mxu0 0.0
    %1649 = vmatpush1.msra.mxu0 0.0
    %1650 = vmatprep.subr.mxu0 0.0
    %1651 = vmatpush1.msra.mxu0 0.0
    %1652 = vmatprep.subr.mxu0 0.0
    %1653 = vmatpush1.msra.mxu0 0.0
    %1654 = vmatprep.subr.mxu0 0.0
    %1655 = vmatpush1.msra.mxu0 0.0
    %1656 = vmatprep.subr.mxu0 0.0
    %1657 = vmatpush1.msra.mxu0 0.0
    %1658 = vmatprep.subr.mxu0 0.0
    %1659 = vmatpush1.msra.mxu0 0.0
    %1660 = vmatprep.subr.mxu0 0.0
    %1661 = vmatpush1.msra.mxu0 0.0
    %1662 = vmatprep.subr.mxu0 0.0
    %1663 = vmatpush1.msra.mxu0 0.0
    %1664 = vmatprep.subr.mxu0 0.0
    %1665 = vmatpush1.msra.mxu0 0.0
    %1666 = vmatprep.subr.mxu0 0.0
    %1667 = vmatpush1.msra.mxu0 0.0
    %1668 = vmatprep.mubr.f32.mxu0 0.0
    %1669 = vmatmul.mubr.f32.gmra.mrb[0].mxu0 %v1501
    %v1670 = vpop.f32.mrb[0].mxu0
    %v1671 = vadd.f32 %v1602, %v1670
    %v1672 = vpop.f32.mrb[0].mxu0
    %1673 = vmatprep.mubr.f32.mxu0 0.0
    %1674 = vmatmul.mubr.f32.gmra.mrb[0].mxu0 %v1506
    %v1675 = vpop.f32.mrb[0].mxu0
    %v1676 = vadd.f32 %v1602, %v1675
    %v1677 = vpop.f32.mrb[0].mxu0
    %1678 = vmatprep.mubr.f32.mxu0 0.0
    %1679 = vmatmul.mubr.f32.gmra.mrb[0].mxu0 %v1511
    %v1680 = vpop.f32.mrb[0].mxu0
    %v1681 = vadd.f32 %v1602, %v1680
    %v1682 = vpop.f32.mrb[0].mxu0
    %1683 = vmatprep.mubr.f32.mxu0 0.0
    %1684 = vmatmul.mubr.f32.gmra.mrb[0].mxu0 %v1516
    %v1685 = vpop.f32.mrb[0].mxu0
    %v1686 = vadd.f32 %v1602, %v1685
    %v1687 = vpop.f32.mrb[0].mxu0
    %1688 = vmatprep.mubr.f32.mxu0 0.0
    %1689 = vmatmul.mubr.f32.gmra.mrb[0].mxu0 %v1521
    %v1690 = vpop.f32.mrb[0].mxu0
    %v1691 = vadd.f32 %v1602, %v1690
    %v1692 = vpop.f32.mrb[0].mxu0
    %1693 = vmatprep.mubr.f32.mxu0 0.0
    %1694 = vmatmul.mubr.f32.gmra.mrb[0].mxu0 %v1526
    %v1695 = vpop.f32.mrb[0].mxu0
    %v1696 = vadd.f32 %v1602, %v1695
    %v1697 = vpop.f32.mrb[0].mxu0
    %1698 = vmatprep.mubr.f32.mxu0 0.0
    %1699 = vmatmul.mubr.f32.gmra.mrb[0].mxu0 %v1531
    %v1700 = vpop.f32.mrb[0].mxu0
    %v1701 = vadd.f32 %v1602, %v1700
    %v1702 = vpop.f32.mrb[0].mxu0
    %1703 = vmatprep.mubr.f32.mxu0 0.0
    %1704 = vmatmul.mubr.f32.gmra.mrb[0].mxu0 %v1536
    %v1705 = vpop.f32.mrb[0].mxu0
    %v1706 = vadd.f32 %v1602, %v1705
    %v1707 = vpop.f32.mrb[0].mxu0
    %1708 = vmatprep.mubr.f32.mxu0 0.0
    %1709 = vmatmul.mubr.f32.gmra.mrb[0].mxu0 %v1541
    %v1710 = vpop.f32.mrb[0].mxu0
    %v1711 = vadd.f32 %v1602, %v1710
    %v1712 = vpop.f32.mrb[0].mxu0
    %1713 = vmatprep.mubr.f32.mxu0 0.0
    %1714 = vmatmul.mubr.f32.gmra.mrb[0].mxu0 %v1546
    %v1715 = vpop.f32.mrb[0].mxu0
    %v1716 = vadd.f32 %v1602, %v1715
    %v1717 = vpop.f32.mrb[0].mxu0
    %1718 = vmatprep.mubr.f32.mxu0 0.0
    %1719 = vmatmul.mubr.f32.gmra.mrb[0].mxu0 %v1551
    %v1720 = vpop.f32.mrb[0].mxu0
    %v1721 = vadd.f32 %v1602, %v1720
    %v1722 = vpop.f32.mrb[0].mxu0
    %1723 = vmatprep.mubr.f32.mxu0 0.0
    %1724 = vmatmul.mubr.f32.gmra.mrb[0].mxu0 %v1556
    %v1725 = vpop.f32.mrb[0].mxu0
    %v1726 = vadd.f32 %v1602, %v1725
    %v1727 = vpop.f32.mrb[0].mxu0
    %1728 = vmatprep.mubr.f32.mxu0 0.0
    %1729 = vmatmul.mubr.f32.gmra.mrb[0].mxu0 %v1561
    %v1730 = vpop.f32.mrb[0].mxu0
    %v1731 = vadd.f32 %v1602, %v1730
    %v1732 = vpop.f32.mrb[0].mxu0
    %1733 = vmatprep.mubr.f32.mxu0 0.0
    %1734 = vmatmul.mubr.f32.gmra.mrb[0].mxu0 %v1566
    %v1735 = vpop.f32.mrb[0].mxu0
    %v1736 = vadd.f32 %v1602, %v1735
    %v1737 = vpop.f32.mrb[0].mxu0
    %1738 = vmatprep.mubr.f32.mxu0 0.0
    %1739 = vmatmul.mubr.f32.gmra.mrb[0].mxu0 %v1571
    %v1740 = vpop.f32.mrb[0].mxu0
    %v1741 = vadd.f32 %v1602, %v1740
    %v1742 = vpop.f32.mrb[0].mxu0
    %1743 = vmatprep.mubr.f32.mxu0 0.0
    %1744 = vmatmul.mubr.f32.gmra.mrb[0].mxu0 %v1576
    %v1745 = vpop.f32.mrb[0].mxu0
    %v1746 = vadd.f32 %v1602, %v1745
    %v1747 = vpop.f32.mrb[0].mxu0
    %1748 = vdwg.mxu0
    %s1749 = sld [smem:[#allocation2]]
    %v1750 = vstv %s1749
    %v1751 = vmul.f32 %v1750, %v1671
    %v1752 = vmul.f32 %v1750, %v1676
    %v1753 = vmul.f32 %v1750, %v1681
    %v1754 = vmul.f32 %v1750, %v1686
    %v1755 = vmul.f32 %v1750, %v1691
    %v1756 = vmul.f32 %v1750, %v1696
    %v1757 = vmul.f32 %v1750, %v1701
    %v1758 = vmul.f32 %v1750, %v1706
    %v1759 = vmul.f32 %v1750, %v1711
    %v1760 = vmul.f32 %v1750, %v1716
    %v1761 = vmul.f32 %v1750, %v1721
    %v1762 = vmul.f32 %v1750, %v1726
    %v1763 = vmul.f32 %v1750, %v1731
    %v1764 = vmul.f32 %v1750, %v1736
    %v1765 = vmul.f32 %v1750, %v1741
    %v1766 = vmul.f32 %v1750, %v1746
    %s1767 = ssub.f32 1.0, %s1749
    %v1768 = vld [vmem:[#allocation9] sm:$0xff]
    %v1769 = vld [vmem:[#allocation9 + $0x8] sm:$0xff]
    %v1770 = vld [vmem:[#allocation9 + $0x10] sm:$0xff]
    %v1771 = vld [vmem:[#allocation9 + $0x18] sm:$0xff]
    %v1772 = vld [vmem:[#allocation9 + $0x20] sm:$0xff]
    %v1773 = vld [vmem:[#allocation9 + $0x28] sm:$0xff]
    %v1774 = vld [vmem:[#allocation9 + $0x30] sm:$0xff]
    %v1775 = vld [vmem:[#allocation9 + $0x38] sm:$0xff]
    %v1776 = vld [vmem:[#allocation9 + $0x40] sm:$0xff]
    %v1777 = vld [vmem:[#allocation9 + $0x48] sm:$0xff]
    %v1778 = vld [vmem:[#allocation9 + $0x50] sm:$0xff]
    %v1779 = vld [vmem:[#allocation9 + $0x58] sm:$0xff]
    %v1780 = vld [vmem:[#allocation9 + $0x60] sm:$0xff]
    %v1781 = vld [vmem:[#allocation9 + $0x68] sm:$0xff]
    %v1782 = vld [vmem:[#allocation9 + $0x70] sm:$0xff]
    %v1783 = vld [vmem:[#allocation9 + $0x78] sm:$0xff]
    %v1784 = vstv %s1767
    %v1785 = vmul.f32 %v1784, %v1768
    %v1786 = vmul.f32 %v1784, %v1769
    %v1787 = vmul.f32 %v1784, %v1770
    %v1788 = vmul.f32 %v1784, %v1771
    %v1789 = vmul.f32 %v1784, %v1772
    %v1790 = vmul.f32 %v1784, %v1773
    %v1791 = vmul.f32 %v1784, %v1774
    %v1792 = vmul.f32 %v1784, %v1775
    %v1793 = vmul.f32 %v1784, %v1776
    %v1794 = vmul.f32 %v1784, %v1777
    %v1795 = vmul.f32 %v1784, %v1778
    %v1796 = vmul.f32 %v1784, %v1779
    %v1797 = vmul.f32 %v1784, %v1780
    %v1798 = vmul.f32 %v1784, %v1781
    %v1799 = vmul.f32 %v1784, %v1782
    %v1800 = vmul.f32 %v1784, %v1783
    %v1801 = vadd.f32 %v1751, %v1785
    %v1802 = vadd.f32 %v1752, %v1786
    %v1803 = vadd.f32 %v1753, %v1787
    %v1804 = vadd.f32 %v1754, %v1788
    %v1805 = vadd.f32 %v1755, %v1789
    %v1806 = vadd.f32 %v1756, %v1790
    %v1807 = vadd.f32 %v1757, %v1791
    %v1808 = vadd.f32 %v1758, %v1792
    %v1809 = vadd.f32 %v1759, %v1793
    %v1810 = vadd.f32 %v1760, %v1794
    %v1811 = vadd.f32 %v1761, %v1795
    %v1812 = vadd.f32 %v1762, %v1796
    %v1813 = vadd.f32 %v1763, %v1797
    %v1814 = vadd.f32 %v1764, %v1798
    %v1815 = vadd.f32 %v1765, %v1799
    %v1816 = vadd.f32 %v1766, %v1800
    %1817 = vst [vmem:[#allocation11] sm:$0xff] %v1801
    %1818 = vst [vmem:[#allocation11 + $0x8] sm:$0xff] %v1802
    %1819 = vst [vmem:[#allocation11 + $0x10] sm:$0xff] %v1803
    %1820 = vst [vmem:[#allocation11 + $0x18] sm:$0xff] %v1804
    %1821 = vst [vmem:[#allocation11 + $0x20] sm:$0xff] %v1805
    %1822 = vst [vmem:[#allocation11 + $0x28] sm:$0xff] %v1806
    %1823 = vst [vmem:[#allocation11 + $0x30] sm:$0xff] %v1807
    %1824 = vst [vmem:[#allocation11 + $0x38] sm:$0xff] %v1808
    %1825 = vst [vmem:[#allocation11 + $0x40] sm:$0xff] %v1809
    %1826 = vst [vmem:[#allocation11 + $0x48] sm:$0xff] %v1810
    %1827 = vst [vmem:[#allocation11 + $0x50] sm:$0xff] %v1811
    %1828 = vst [vmem:[#allocation11 + $0x58] sm:$0xff] %v1812
    %1829 = vst [vmem:[#allocation11 + $0x60] sm:$0xff] %v1813
    %1830 = vst [vmem:[#allocation11 + $0x68] sm:$0xff] %v1814
    %1831 = vst [vmem:[#allocation11 + $0x70] sm:$0xff] %v1815
    %1832 = vst [vmem:[#allocation11 + $0x78] sm:$0xff] %v1816
    // Predicated region
    $region42: #{tpu_custom_call.1} parent=1 // pred_check
      _
    $region43: #{tpu_custom_call.1} parent=1 // pred_check_branch
      %1834 = sbr.rel (0) target = $region45
    $region44: #{tpu_custom_call.1} parent=1 // pred_region
      %s1836 = ssub.s32 2048, 2048
      %1837 = vsyncadd [#allocation5], %s1836
      %s1838 = sshll.u32 [#allocation11], 4
      %s1839 = int_to_ptr.vmem [resolvable:$true] %s1838
      %1844 = dma.vmem_to_hbm [thread:$0]  %s1839, 2048, %s6, [#allocation5], 128, 128, 8
    $region45: #{tpu_custom_call.1} parent=1 // pred_fallthru
      _
    // Predicated region
    $region46: #{tpu_custom_call.1} parent=1 // pred_check
      _
    $region47: #{tpu_custom_call.1} parent=1 // pred_check_branch
      %1846 = sbr.rel (0) target = $region49
    $region48: #{tpu_custom_call.1} parent=1 // pred_region
      %1847 = dma.done [#allocation5], 2048
    $region49: #{tpu_custom_call.1} parent=1 // pred_fallthru
      _
    %1848 = vsyncpa [#allocation4], 1
    %1849 = vsyncpa [#allocation7], 1
    %1850 = vsyncpa [#allocation10], 1
    %1851 = vsyncpa [#allocation5], 1

</llo_original>
